<compile_context>
chip_gen: v7x
topology: tpu7x:2x2x1
jax: 0.10.0
libtpu: 0.0.40
codegen_flags: <defaults>
</compile_context>

<pallas_src>
import math

import jax
import jax.numpy as jnp
import numpy as np
from jax.experimental import pallas as pl
from jax.experimental.pallas import tpu as pltpu


def _make_bilstm_kernel(tile_t, bp, hdim):
    """Fused, chunk-streaming bidirectional LSTM kernel (one MXU push per step)."""
    H = hdim

    def kernel(xf_ref, xb_ref, len_ref,
               wih_f_ref, wih_b_ref, whh_ref, b_f_ref, b_b_ref,
               out_f_ref, out_b_ref, hfin_ref,
               h_f, c_f, h_b, c_b):
        i = pl.program_id(0)
        nchunks = pl.num_programs(0)

        @pl.when(i == 0)
        def _init():
            h_f[...] = jnp.zeros_like(h_f)
            c_f[...] = jnp.zeros_like(c_f)
            h_b[...] = jnp.zeros_like(h_b)
            c_b[...] = jnp.zeros_like(c_b)

        lens = len_ref[...]                       # (Bp, 1) int32

        # ---- hoisted input projection: one bf16 MXU matmul per direction per
        # chunk, bias folded in (f32 accumulate). ----
        xf = xf_ref[0]                            # (tile_t*Bp, E) bf16, fwd chunk i
        xb = xb_ref[0]                            # (tile_t*Bp, E) bf16, bwd chunk n-1-i
        gx_f = jnp.dot(xf, wih_f_ref[...],
                       preferred_element_type=jnp.float32) + b_f_ref[...]
        gx_b = jnp.dot(xb, wih_b_ref[...],
                       preferred_element_type=jnp.float32) + b_b_ref[...]

        whh = whh_ref[...]                        # (H, 8H) bf16 = [Whh_f | Whh_b]

        t0_f = i * tile_t
        t0_b = (nchunks - 1 - i) * tile_t

        # carries live in registers within a chunk; scratch only across chunks
        hf, cf = h_f[...], c_f[...]
        hb, cb = h_b[...], c_b[...]

        def cell_tail(g, c):
            # gate order (i, f, o, g): one sigmoid slab + one tanh slab
            sg = jax.nn.sigmoid(g[:, :3 * H])
            gg = jnp.tanh(g[:, 3 * H:])
            c_new = sg[:, H:2 * H] * c + sg[:, :H] * gg
            h_new = sg[:, 2 * H:] * jnp.tanh(c_new)
            return h_new, c_new

        # fully-unrolled fused time loop over this chunk: forward processes chunk i
        # ascending, backward processes chunk (n-1-i) descending; both independent
        # recurrences share one MXU push per step.
        for s in range(tile_t):
            sb = tile_t - 1 - s
            rows_f = slice(s * bp, (s + 1) * bp)
            rows_b = slice(sb * bp, (sb + 1) * bp)

            # single fused recurrent matmul for both directions (cross blocks unused)
            hcat = jnp.concatenate([hf, hb], axis=0).astype(jnp.bfloat16)  # (2Bp, H)
            gh = jnp.dot(hcat, whh, preferred_element_type=jnp.float32)    # (2Bp, 8H)

            hf_new, cf_new = cell_tail(gx_f[rows_f, :] + gh[:bp, :4 * H], cf)
            hb_new, cb_new = cell_tail(gx_b[rows_b, :] + gh[bp:, 4 * H:], cb)

            mf = (t0_f + s) < lens                # (Bp, 1) bool
            hf = jnp.where(mf, hf_new, hf)        # freeze state past length
            cf = jnp.where(mf, cf_new, cf)
            out_f_ref[0, rows_f, :] = jnp.where(mf, hf_new, 0.0)

            mb = (t0_b + sb) < lens
            hb = jnp.where(mb, hb_new, hb)
            cb = jnp.where(mb, cb_new, cb)
            out_b_ref[0, rows_b, :] = jnp.where(mb, hb_new, 0.0)

        h_f[...], c_f[...] = hf, cf
        h_b[...], c_b[...] = hb, cb

        # final hiddens written only on the last chunk (block is grid-resident):
        # fwd frozen at lengths-1, bwd state after t=0
        @pl.when(i == nchunks - 1)
        def _fin():
            hfin_ref[:, :H] = hf
            hfin_ref[:, H:] = hb

    return kernel


def _bilstm_pallas(x_chunks, lens_col, wih_f, wih_b, whh_cat, b_f, b_b,
                   *, tile_t, bp, hdim, vmem_limit):
    nchunks, chunk_rows, e = x_chunks.shape
    H = hdim
    kernel = _make_bilstm_kernel(tile_t, bp, H)

    const2 = lambda i: (0, 0)
    single = pl.Buffered(1)   # resident operands: never re-fetched -> single buffer

    in_specs = [
        pl.BlockSpec((1, chunk_rows, e), lambda i: (i, 0, 0)),                # x (fwd chunk)
        pl.BlockSpec((1, chunk_rows, e), lambda i: (nchunks - 1 - i, 0, 0)),  # x (bwd chunk)
        pl.BlockSpec((bp, 1), const2, pipeline_mode=single),                  # lengths
        pl.BlockSpec((e, 4 * H), const2, pipeline_mode=single),               # W_ih fwd (resident)
        pl.BlockSpec((e, 4 * H), const2, pipeline_mode=single),               # W_ih bwd
        pl.BlockSpec((H, 8 * H), const2, pipeline_mode=single),               # [Whh_f | Whh_b]
        pl.BlockSpec((1, 4 * H), const2, pipeline_mode=single),               # bias fwd
        pl.BlockSpec((1, 4 * H), const2, pipeline_mode=single),               # bias bwd
    ]
    out_specs = (
        pl.BlockSpec((1, chunk_rows, H), lambda i: (i, 0, 0)),                # fwd outputs
        pl.BlockSpec((1, chunk_rows, H), lambda i: (nchunks - 1 - i, 0, 0)),  # bwd outputs
        pl.BlockSpec((bp, 2 * H), const2),                                    # final hiddens
    )
    out_shape = (
        jax.ShapeDtypeStruct((nchunks, chunk_rows, H), jnp.float32),
        jax.ShapeDtypeStruct((nchunks, chunk_rows, H), jnp.float32),
        jax.ShapeDtypeStruct((bp, 2 * H), jnp.float32),
    )
    grid_spec = pltpu.PrefetchScalarGridSpec(
        num_scalar_prefetch=0,
        grid=(nchunks,),
        in_specs=in_specs,
        out_specs=out_specs,
        scratch_shapes=[pltpu.VMEM((bp, H), jnp.float32)] * 4,   # h_f, c_f, h_b, c_b
    )
    return pl.pallas_call(
        kernel,
        out_shape=out_shape,
        grid_spec=grid_spec,
        compiler_params=pltpu.CompilerParams(
            dimension_semantics=("arbitrary",),      # time axis carries the recurrence
            vmem_limit_bytes=int(vmem_limit),        # chip-derived (see _vmem_limit)
        ),
    )(x_chunks, x_chunks, lens_col, wih_f, wih_b, whh_cat, b_f, b_b)


def _reorder_ifgo_to_ifog(w):
    """Permute the last (4H) axis from torch's (i,f,g,o) to (i,f,o,g)."""
    H = w.shape[-1] // 4
    return jnp.concatenate(
        [w[..., :2 * H], w[..., 3 * H:], w[..., 2 * H:3 * H]], axis=-1)


def _vmem_limit_bytes():
    """~75% of physical VMEM: ~96 MiB on v5e/v6e (128 MiB), ~48 MiB on v7x (64 MiB)."""
    try:
        cap = int(pltpu.get_tpu_info().vmem_capacity_bytes)
    except Exception:
        cap = 64 * 1024 * 1024
    return max(32 * 1024 * 1024, min(cap * 3 // 4, cap - (12 << 20)))


def _pick_tile_t(time_tile, T, Bp, E, H, vmem_limit):
    """Largest chunk size <= time_tile whose pipeline buffers + live gx slabs fit."""
    tile = max(1, min(int(time_tile), int(T)))
    resident = (2 * E * 4 * H) * 2 + (H * 8 * H) * 2 + 2 * (4 * H) * 4 \
               + Bp * 4 + Bp * 2 * H * 4 + 4 * (Bp * H) * 4
    budget = int(vmem_limit * 0.6)
    while tile > 1:
        rows = tile * Bp
        stream = 2 * (2 * rows * E * 2)       # xf, xb double-buffered bf16
        stream += 2 * (2 * rows * H * 4)      # out_f, out_b double-buffered f32
        live = 2 * rows * 4 * H * 4           # gx_f, gx_b f32 intermediates
        if resident + stream + live <= budget:
            break
        tile = max(1, tile // 2)
    return tile


class EncoderPallas:
    """JAX/Pallas port of Encoder(embedding_dim, hidden_dim, vocab_size,
    encode_sel='lstm', layers=1, dropout=0.0, bidirectional=True)."""

    def __init__(self, embedding_dim, hidden_dim, vocab_size, key):
        self.embedding_dim = embedding_dim
        self.hidden_dim = hidden_dim
        self.vocab_size = vocab_size
        keys = jax.random.split(key, 9)

        # nn.Embedding(...).weight.data.uniform_(0.0, 1.0)
        self.embedding = jax.random.uniform(
            keys[0], (vocab_size, embedding_dim), jnp.float32, 0.0, 1.0)

        # torch.nn.LSTM default init: U(-1/sqrt(H), 1/sqrt(H)), gate order (i,f,g,o)
        H, E = hidden_dim, embedding_dim
        stdv = 1.0 / math.sqrt(H)

        def u(k, shape):
            return jax.random.uniform(k, shape, jnp.float32, -stdv, stdv)

        self.w_ih_f = u(keys[1], (4 * H, E))
        self.w_hh_f = u(keys[2], (4 * H, H))
        self.b_ih_f = u(keys[3], (4 * H,))
        self.b_hh_f = u(keys[4], (4 * H,))
        self.w_ih_b = u(keys[5], (4 * H, E))
        self.w_hh_b = u(keys[6], (4 * H, H))
        self.b_ih_b = u(keys[7], (4 * H,))
        self.b_hh_b = u(keys[8], (4 * H,))

        # Kernel-layout params (done once): transpose, gate reorder (i,f,o,g),
        # combined bias b_ih+b_hh, bf16 weights for the MXU (biases stay f32),
        # recurrent weights pre-concatenated for the fused per-step matmul.
        self._wih_f = _reorder_ifgo_to_ifog(self.w_ih_f.T).astype(jnp.bfloat16)   # (E,4H)
        self._wih_b = _reorder_ifgo_to_ifog(self.w_ih_b.T).astype(jnp.bfloat16)   # (E,4H)
        self._whh_cat = jnp.concatenate(
            [_reorder_ifgo_to_ifog(self.w_hh_f.T),
             _reorder_ifgo_to_ifog(self.w_hh_b.T)], axis=1).astype(jnp.bfloat16)  # (H,8H)
        self._b_f = _reorder_ifgo_to_ifog(self.b_ih_f + self.b_hh_f)[None, :]     # (1,4H) f32
        self._b_b = _reorder_ifgo_to_ifog(self.b_ih_b + self.b_hh_b)[None, :]

        self._vmem_limit = _vmem_limit_bytes()

    def __call__(self, input_ids, lengths, ig=1, time_tile=32):
        ids = jnp.asarray(input_ids, jnp.int32)
        B, T = ids.shape
        E, H = self.embedding_dim, self.hidden_dim

        # Fold `ig` into the input-projection weights (x only enters the LSTM via
        # x @ W_ih) -> removes the full (B,T,E) `embed * ig` HBM pass.
        wih_f, wih_b = self._wih_f, self._wih_b
        if not (isinstance(ig, (int, float)) and float(ig) == 1.0):
            s = jnp.asarray(ig, jnp.float32)
            wih_f = (wih_f.astype(jnp.float32) * s).astype(jnp.bfloat16)
            wih_b = (wih_b.astype(jnp.float32) * s).astype(jnp.bfloat16)

        # pad batch to a sublane multiple, time to a multiple of the chunk
        Bp = -(-B // 8) * 8
        tile_t = _pick_tile_t(time_tile, T, Bp, E, H, self._vmem_limit)
        Tp = -(-T // tile_t) * tile_t
        nchunks = Tp // tile_t

        # Embedding gathered directly in time-major order + bf16 cast: no separate
        # f32 (B,T,E) transpose pass in the wrapper. padding_idx=0 only affects grads.
        x_tm = jnp.take(self.embedding, ids.T, axis=0).astype(jnp.bfloat16)   # (T,B,E)
        x_tm = jnp.pad(x_tm, ((0, Tp - T), (0, Bp - B), (0, 0)))
        x_chunks = x_tm.reshape(nchunks, tile_t * Bp, E)

        lens_col = jnp.pad(jnp.asarray(lengths, jnp.int32), (0, Bp - B))[:, None]  # (Bp,1)

        out_f, out_b, hfin = _bilstm_pallas(
            x_chunks, lens_col, wih_f, wih_b, self._whh_cat, self._b_f, self._b_b,
            tile_t=tile_t, bp=Bp, hdim=H, vmem_limit=self._vmem_limit)

        out_f = out_f.reshape(Tp, Bp, H)
        out_b = out_b.reshape(Tp, Bp, H)
        output = jnp.concatenate([out_f, out_b], axis=-1)              # (Tp,Bp,2H)
        output = jnp.transpose(output, (1, 0, 2))[:B]                  # (B,Tp,2H)

        # pad_packed_sequence(batch_first=True) returns max(lengths) steps.
        # Only slice with a host value when lengths are host-side; otherwise
        # return the full length (avoids device sync / per-max-length recompiles).
        if isinstance(lengths, (list, tuple)):
            output = output[:, :int(max(lengths)), :]
        else:
            output = output[:, :T, :]

        # dropout p=0.0 -> identity
        last_hidden = hfin[:B]                                         # (B,2H) = [h_fwd | h_bwd]
        return output, last_hidden


if __name__ == "__main__":
    key = jax.random.PRNGKey(0)
    k_param, k_ids = jax.random.split(key)

    batch = 2
    seq = 8
    embedding_dim = 32
    hidden_dim = 32
    vocab_size = 16

    enc = EncoderPallas(embedding_dim, hidden_dim, vocab_size, k_param)

    lengths = [8, 5]
    ids = jax.random.randint(k_ids, (batch, seq), 1, vocab_size, dtype=jnp.int32)
    pad_mask = (jnp.arange(seq)[None, :] < jnp.asarray(lengths)[:, None])
    ids = jnp.where(pad_mask, ids, 0)

    # time_tile=4 -> 2 time chunks, exercising the streamed carry across the grid
    output, last_hidden = enc(ids, lengths, ig=1, time_tile=4)
    jax.block_until_ready((output, last_hidden))

    assert output.shape == (batch, max(lengths), 2 * hidden_dim), output.shape
    assert last_hidden.shape == (batch, 2 * hidden_dim), last_hidden.shape

    # -------- pure-JAX f32 reference (packed bidirectional LSTM semantics) --------
    emb = enc.embedding[ids]
    x_tm = jnp.transpose(emb, (1, 0, 2))                              # (T,B,E)
    lens_arr = jnp.asarray(lengths, jnp.int32)

    def ref_dir(w_ih, w_hh, b_ih, b_hh, reverse):
        Hh = hidden_dim
        h = jnp.zeros((batch, Hh), jnp.float32)
        c = jnp.zeros((batch, Hh), jnp.float32)
        outs = [None] * seq
        order = range(seq - 1, -1, -1) if reverse else range(seq)
        for t in order:
            gates = x_tm[t] @ w_ih.T + h @ w_hh.T + b_ih + b_hh
            i_g = jax.nn.sigmoid(gates[:, :Hh])
            f_g = jax.nn.sigmoid(gates[:, Hh:2 * Hh])
            g_g = jnp.tanh(gates[:, 2 * Hh:3 * Hh])
            o_g = jax.nn.sigmoid(gates[:, 3 * Hh:])
            c_new = f_g * c + i_g * g_g
            h_new = o_g * jnp.tanh(c_new)
            m = (t < lens_arr)[:, None]
            h = jnp.where(m, h_new, h)
            c = jnp.where(m, c_new, c)
            outs[t] = jnp.where(m, h, 0.0)
        return jnp.stack(outs, 0), h

    of, hf = ref_dir(enc.w_ih_f, enc.w_hh_f, enc.b_ih_f, enc.b_hh_f, False)
    ob, hb = ref_dir(enc.w_ih_b, enc.w_hh_b, enc.b_ih_b, enc.b_hh_b, True)
    ref_out = jnp.concatenate([of, ob], -1).transpose(1, 0, 2)[:, :max(lengths)]
    ref_last = jnp.concatenate([hf, hb], -1)

    np.testing.assert_allclose(np.asarray(output), np.asarray(ref_out),
                               atol=5e-2, rtol=0)
    np.testing.assert_allclose(np.asarray(last_hidden), np.asarray(ref_last),
                               atol=5e-2, rtol=0)
    print("KERNEL_OK")
</pallas_src>

<mosaic_0001>
module attributes {stable_mosaic.version = 11 : i64} {
  func.func @kernel(%arg0: i32, %arg1: memref<1x32x32xbf16, #tpu.memory_space<vmem>>, %arg2: memref<1x32x32xbf16, #tpu.memory_space<vmem>>, %arg3: memref<8x1xi32, #tpu.memory_space<vmem>>, %arg4: memref<32x128xbf16, #tpu.memory_space<vmem>>, %arg5: memref<32x128xbf16, #tpu.memory_space<vmem>>, %arg6: memref<32x256xbf16, #tpu.memory_space<vmem>>, %arg7: memref<1x128xf32, #tpu.memory_space<vmem>>, %arg8: memref<1x128xf32, #tpu.memory_space<vmem>>, %arg9: memref<1x32x32xf32, #tpu.memory_space<vmem>>, %arg10: memref<1x32x32xf32, #tpu.memory_space<vmem>>, %arg11: memref<8x64xf32, #tpu.memory_space<vmem>>, %arg12: memref<8x32xf32, #tpu.memory_space<vmem>>, %arg13: memref<8x32xf32, #tpu.memory_space<vmem>>, %arg14: memref<8x32xf32, #tpu.memory_space<vmem>>, %arg15: memref<8x32xf32, #tpu.memory_space<vmem>>) attributes {dimension_semantics = [#tpu.dimension_semantics<arbitrary>], iteration_bounds = array<i64: 2>, scalar_prefetch = 0 : i64, scratch_operands = 4 : i64, tpu.core_type = #tpu.core_type<tc>, window_params = [{transform_indices = @transform_0, window_bounds = array<i64: 1, 32, 32>}, {transform_indices = @transform_1, window_bounds = array<i64: 1, 32, 32>}, {pipeline_mode = #tpu.pipeline_mode<synchronous>, transform_indices = @transform_2, window_bounds = array<i64: 8, 1>}, {pipeline_mode = #tpu.pipeline_mode<synchronous>, transform_indices = @transform_3, window_bounds = array<i64: 32, 128>}, {pipeline_mode = #tpu.pipeline_mode<synchronous>, transform_indices = @transform_4, window_bounds = array<i64: 32, 128>}, {pipeline_mode = #tpu.pipeline_mode<synchronous>, transform_indices = @transform_5, window_bounds = array<i64: 32, 256>}, {pipeline_mode = #tpu.pipeline_mode<synchronous>, transform_indices = @transform_6, window_bounds = array<i64: 1, 128>}, {pipeline_mode = #tpu.pipeline_mode<synchronous>, transform_indices = @transform_7, window_bounds = array<i64: 1, 128>}, {transform_indices = @transform_8, window_bounds = array<i64: 1, 32, 32>}, {transform_indices = @transform_9, window_bounds = array<i64: 1, 32, 32>}, {pipeline_mode = #tpu.pipeline_mode<synchronous>, transform_indices = @transform_10, window_bounds = array<i64: 8, 64>}]} {
    %c0_i32 = arith.constant 0 : i32
    %0 = arith.cmpi eq, %arg0, %c0_i32 : i32
    %1 = arith.extui %0 : i1 to i32
    %c0_i32_0 = arith.constant 0 : i32
    %2 = arith.cmpi ne, %1, %c0_i32_0 : i32
    scf.if %2 {
      %cst_85 = arith.constant 0.000000e+00 : f32
      %325 = vector.broadcast %cst_85 : f32 to vector<8x32xf32>
      %c0_86 = arith.constant 0 : index
      %c0_87 = arith.constant 0 : index
      %326 = vector.load %arg12[%c0_86, %c0_87] : memref<8x32xf32, #tpu.memory_space<vmem>>, vector<8x32xf32>
      tpu.vector_store %arg12[%c0_86, %c0_87], %325 {strides = array<i32>} : memref<8x32xf32, #tpu.memory_space<vmem>>, vector<8x32xf32>,
      %cst_88 = arith.constant 0.000000e+00 : f32
      %327 = vector.broadcast %cst_88 : f32 to vector<8x32xf32>
      %c0_89 = arith.constant 0 : index
      %c0_90 = arith.constant 0 : index
      %328 = vector.load %arg13[%c0_89, %c0_90] : memref<8x32xf32, #tpu.memory_space<vmem>>, vector<8x32xf32>
      tpu.vector_store %arg13[%c0_89, %c0_90], %327 {strides = array<i32>} : memref<8x32xf32, #tpu.memory_space<vmem>>, vector<8x32xf32>,
      %cst_91 = arith.constant 0.000000e+00 : f32
      %329 = vector.broadcast %cst_91 : f32 to vector<8x32xf32>
      %c0_92 = arith.constant 0 : index
      %c0_93 = arith.constant 0 : index
      %330 = vector.load %arg14[%c0_92, %c0_93] : memref<8x32xf32, #tpu.memory_space<vmem>>, vector<8x32xf32>
      tpu.vector_store %arg14[%c0_92, %c0_93], %329 {strides = array<i32>} : memref<8x32xf32, #tpu.memory_space<vmem>>, vector<8x32xf32>,
      %cst_94 = arith.constant 0.000000e+00 : f32
      %331 = vector.broadcast %cst_94 : f32 to vector<8x32xf32>
      %c0_95 = arith.constant 0 : index
      %c0_96 = arith.constant 0 : index
      %332 = vector.load %arg15[%c0_95, %c0_96] : memref<8x32xf32, #tpu.memory_space<vmem>>, vector<8x32xf32>
      tpu.vector_store %arg15[%c0_95, %c0_96], %331 {strides = array<i32>} : memref<8x32xf32, #tpu.memory_space<vmem>>, vector<8x32xf32>,
    } else {
    }
    %c0 = arith.constant 0 : index
    %c0_1 = arith.constant 0 : index
    %3 = vector.load %arg3[%c0, %c0_1] : memref<8x1xi32, #tpu.memory_space<vmem>>, vector<8x1xi32>
    %c0_2 = arith.constant 0 : index
    %c0_3 = arith.constant 0 : index
    %c0_4 = arith.constant 0 : index
    %4 = vector.load %arg1[%c0_2, %c0_3, %c0_4] : memref<1x32x32xbf16, #tpu.memory_space<vmem>>, vector<1x32x32xbf16>
    %5 = vector.shape_cast %4 : vector<1x32x32xbf16> to vector<32x32xbf16>
    %c0_5 = arith.constant 0 : index
    %c0_6 = arith.constant 0 : index
    %c0_7 = arith.constant 0 : index
    %6 = vector.load %arg2[%c0_5, %c0_6, %c0_7] : memref<1x32x32xbf16, #tpu.memory_space<vmem>>, vector<1x32x32xbf16>
    %7 = vector.shape_cast %6 : vector<1x32x32xbf16> to vector<32x32xbf16>
    %c0_8 = arith.constant 0 : index
    %c0_9 = arith.constant 0 : index
    %8 = vector.load %arg4[%c0_8, %c0_9] : memref<32x128xbf16, #tpu.memory_space<vmem>>, vector<32x128xbf16>
    %cst = arith.constant dense<0.000000e+00> : vector<32x128xf32>
    %9 = tpu.matmul %5, %8, %cst {dimension_numbers = #tpu.dot_dimension_numbers<[1], [0], [0], [1], [0, 0, 1, 1], [], []>} : vector<32x32xbf16>, vector<32x128xbf16>, vector<32x128xf32> -> vector<32x128xf32>
    %c0_10 = arith.constant 0 : index
    %c0_11 = arith.constant 0 : index
    %10 = vector.load %arg7[%c0_10, %c0_11] : memref<1x128xf32, #tpu.memory_space<vmem>>, vector<1x128xf32>
    %11 = vector.broadcast %10 : vector<1x128xf32> to vector<32x128xf32>
    %12 = arith.addf %9, %11 : vector<32x128xf32>
    %c0_12 = arith.constant 0 : index
    %c0_13 = arith.constant 0 : index
    %13 = vector.load %arg5[%c0_12, %c0_13] : memref<32x128xbf16, #tpu.memory_space<vmem>>, vector<32x128xbf16>
    %cst_14 = arith.constant dense<0.000000e+00> : vector<32x128xf32>
    %14 = tpu.matmul %7, %13, %cst_14 {dimension_numbers = #tpu.dot_dimension_numbers<[1], [0], [0], [1], [0, 0, 1, 1], [], []>} : vector<32x32xbf16>, vector<32x128xbf16>, vector<32x128xf32> -> vector<32x128xf32>
    %c0_15 = arith.constant 0 : index
    %c0_16 = arith.constant 0 : index
    %15 = vector.load %arg8[%c0_15, %c0_16] : memref<1x128xf32, #tpu.memory_space<vmem>>, vector<1x128xf32>
    %16 = vector.broadcast %15 : vector<1x128xf32> to vector<32x128xf32>
    %17 = arith.addf %14, %16 : vector<32x128xf32>
    %c0_17 = arith.constant 0 : index
    %c0_18 = arith.constant 0 : index
    %18 = vector.load %arg6[%c0_17, %c0_18] : memref<32x256xbf16, #tpu.memory_space<vmem>>, vector<32x256xbf16>
    %c4_i32 = arith.constant 4 : i32
    %19 = arith.muli %arg0, %c4_i32 : i32
    %c1_i32 = arith.constant 1 : i32
    %20 = arith.subi %c1_i32, %arg0 : i32
    %c4_i32_19 = arith.constant 4 : i32
    %21 = arith.muli %20, %c4_i32_19 : i32
    %c0_20 = arith.constant 0 : index
    %c0_21 = arith.constant 0 : index
    %22 = vector.load %arg12[%c0_20, %c0_21] : memref<8x32xf32, #tpu.memory_space<vmem>>, vector<8x32xf32>
    %c0_22 = arith.constant 0 : index
    %c0_23 = arith.constant 0 : index
    %23 = vector.load %arg13[%c0_22, %c0_23] : memref<8x32xf32, #tpu.memory_space<vmem>>, vector<8x32xf32>
    %c0_24 = arith.constant 0 : index
    %c0_25 = arith.constant 0 : index
    %24 = vector.load %arg14[%c0_24, %c0_25] : memref<8x32xf32, #tpu.memory_space<vmem>>, vector<8x32xf32>
    %c0_26 = arith.constant 0 : index
    %c0_27 = arith.constant 0 : index
    %25 = vector.load %arg15[%c0_26, %c0_27] : memref<8x32xf32, #tpu.memory_space<vmem>>, vector<8x32xf32>
    %26 = tpu.concatenate %22, %24 in 0 : vector<8x32xf32>, vector<8x32xf32> -> vector<16x32xf32>
    %27 = arith.truncf %26 : vector<16x32xf32> to vector<16x32xbf16>
    %cst_28 = arith.constant dense<0.000000e+00> : vector<16x256xf32>
    %28 = tpu.matmul %27, %18, %cst_28 {dimension_numbers = #tpu.dot_dimension_numbers<[1], [0], [0], [1], [0, 0, 1, 1], [], []>} : vector<16x32xbf16>, vector<32x256xbf16>, vector<16x256xf32> -> vector<16x256xf32>
    %29 = vector.extract_strided_slice %12 {offsets = [0, 0], sizes = [8, 128], strides = [1, 1]} : vector<32x128xf32> to vector<8x128xf32>
    %30 = vector.extract_strided_slice %28 {offsets = [0, 0], sizes = [8, 128], strides = [1, 1]} : vector<16x256xf32> to vector<8x128xf32>
    %31 = arith.addf %29, %30 : vector<8x128xf32>
    %32 = vector.extract_strided_slice %31 {offsets = [0, 0], sizes = [8, 96], strides = [1, 1]} : vector<8x128xf32> to vector<8x96xf32>
    %33 = arith.negf %32 : vector<8x96xf32>
    %34 = math.exp %33 : vector<8x96xf32>
    %cst_29 = arith.constant 1.000000e+00 : f32
    %35 = vector.broadcast %cst_29 : f32 to vector<8x96xf32>
    %36 = arith.addf %35, %34 : vector<8x96xf32>
    %37 = arith.divf %35, %36 : vector<8x96xf32>
    %38 = vector.extract_strided_slice %31 {offsets = [0, 96], sizes = [8, 32], strides = [1, 1]} : vector<8x128xf32> to vector<8x32xf32>
    %39 = math.tanh %38 : vector<8x32xf32>
    %40 = vector.extract_strided_slice %37 {offsets = [0, 32], sizes = [8, 32], strides = [1, 1]} : vector<8x96xf32> to vector<8x32xf32>
    %41 = arith.mulf %40, %23 : vector<8x32xf32>
    %42 = vector.extract_strided_slice %37 {offsets = [0, 0], sizes = [8, 32], strides = [1, 1]} : vector<8x96xf32> to vector<8x32xf32>
    %43 = arith.mulf %42, %39 : vector<8x32xf32>
    %44 = arith.addf %41, %43 : vector<8x32xf32>
    %45 = vector.extract_strided_slice %37 {offsets = [0, 64], sizes = [8, 32], strides = [1, 1]} : vector<8x96xf32> to vector<8x32xf32>
    %46 = math.tanh %44 : vector<8x32xf32>
    %47 = arith.mulf %45, %46 : vector<8x32xf32>
    %48 = vector.extract_strided_slice %17 {offsets = [24, 0], sizes = [8, 128], strides = [1, 1]} : vector<32x128xf32> to vector<8x128xf32>
    %49 = vector.extract_strided_slice %28 {offsets = [8, 128], sizes = [8, 128], strides = [1, 1]} : vector<16x256xf32> to vector<8x128xf32>
    %50 = arith.addf %48, %49 : vector<8x128xf32>
    %51 = vector.extract_strided_slice %50 {offsets = [0, 0], sizes = [8, 96], strides = [1, 1]} : vector<8x128xf32> to vector<8x96xf32>
    %52 = arith.negf %51 : vector<8x96xf32>
    %53 = math.exp %52 : vector<8x96xf32>
    %cst_30 = arith.constant 1.000000e+00 : f32
    %54 = vector.broadcast %cst_30 : f32 to vector<8x96xf32>
    %55 = arith.addf %54, %53 : vector<8x96xf32>
    %56 = arith.divf %54, %55 : vector<8x96xf32>
    %57 = vector.extract_strided_slice %50 {offsets = [0, 96], sizes = [8, 32], strides = [1, 1]} : vector<8x128xf32> to vector<8x32xf32>
    %58 = math.tanh %57 : vector<8x32xf32>
    %59 = vector.extract_strided_slice %56 {offsets = [0, 32], sizes = [8, 32], strides = [1, 1]} : vector<8x96xf32> to vector<8x32xf32>
    %60 = arith.mulf %59, %25 : vector<8x32xf32>
    %61 = vector.extract_strided_slice %56 {offsets = [0, 0], sizes = [8, 32], strides = [1, 1]} : vector<8x96xf32> to vector<8x32xf32>
    %62 = arith.mulf %61, %58 : vector<8x32xf32>
    %63 = arith.addf %60, %62 : vector<8x32xf32>
    %64 = vector.extract_strided_slice %56 {offsets = [0, 64], sizes = [8, 32], strides = [1, 1]} : vector<8x96xf32> to vector<8x32xf32>
    %65 = math.tanh %63 : vector<8x32xf32>
    %66 = arith.mulf %64, %65 : vector<8x32xf32>
    %c0_i32_31 = arith.constant 0 : i32
    %67 = arith.addi %19, %c0_i32_31 : i32
    %68 = vector.broadcast %67 : i32 to vector<8x1xi32>
    %69 = arith.cmpi slt, %68, %3 : vector<8x1xi32>
    %70 = vector.shape_cast %69 : vector<8x1xi1> to vector<8x1xi1>
    %71 = vector.broadcast %70 : vector<8x1xi1> to vector<8x32xi1>
    %72 = arith.select %71, %47, %22 : vector<8x32xi1>, vector<8x32xf32>
    %73 = vector.shape_cast %69 : vector<8x1xi1> to vector<8x1xi1>
    %74 = vector.broadcast %73 : vector<8x1xi1> to vector<8x32xi1>
    %75 = arith.select %74, %44, %23 : vector<8x32xi1>, vector<8x32xf32>
    %cst_32 = arith.constant 0.000000e+00 : f32
    %76 = vector.shape_cast %69 : vector<8x1xi1> to vector<8x1xi1>
    %77 = vector.broadcast %76 : vector<8x1xi1> to vector<8x32xi1>
    %78 = vector.broadcast %cst_32 : f32 to vector<8x32xf32>
    %79 = arith.select %77, %47, %78 : vector<8x32xi1>, vector<8x32xf32>
    %c0_33 = arith.constant 0 : index
    %c0_34 = arith.constant 0 : index
    %c0_35 = arith.constant 0 : index
    %80 = vector.load %arg9[%c0_33, %c0_34, %c0_35] : memref<1x32x32xf32, #tpu.memory_space<vmem>>, vector<1x8x32xf32>
    %81 = vector.shape_cast %80 : vector<1x8x32xf32> to vector<8x32xf32>
    %82 = vector.shape_cast %79 : vector<8x32xf32> to vector<1x8x32xf32>
    tpu.vector_store %arg9[%c0_33, %c0_34, %c0_35], %82 {strides = array<i32>} : memref<1x32x32xf32, #tpu.memory_space<vmem>>, vector<1x8x32xf32>,
    %c3_i32 = arith.constant 3 : i32
    %83 = arith.addi %21, %c3_i32 : i32
    %84 = vector.broadcast %83 : i32 to vector<8x1xi32>
    %85 = arith.cmpi slt, %84, %3 : vector<8x1xi32>
    %86 = vector.shape_cast %85 : vector<8x1xi1> to vector<8x1xi1>
    %87 = vector.broadcast %86 : vector<8x1xi1> to vector<8x32xi1>
    %88 = arith.select %87, %66, %24 : vector<8x32xi1>, vector<8x32xf32>
    %89 = vector.shape_cast %85 : vector<8x1xi1> to vector<8x1xi1>
    %90 = vector.broadcast %89 : vector<8x1xi1> to vector<8x32xi1>
    %91 = arith.select %90, %63, %25 : vector<8x32xi1>, vector<8x32xf32>
    %cst_36 = arith.constant 0.000000e+00 : f32
    %92 = vector.shape_cast %85 : vector<8x1xi1> to vector<8x1xi1>
    %93 = vector.broadcast %92 : vector<8x1xi1> to vector<8x32xi1>
    %94 = vector.broadcast %cst_36 : f32 to vector<8x32xf32>
    %95 = arith.select %93, %66, %94 : vector<8x32xi1>, vector<8x32xf32>
    %c0_37 = arith.constant 0 : index
    %c24 = arith.constant 24 : index
    %c0_38 = arith.constant 0 : index
    %96 = vector.load %arg10[%c0_37, %c24, %c0_38] : memref<1x32x32xf32, #tpu.memory_space<vmem>>, vector<1x8x32xf32>
    %97 = vector.shape_cast %96 : vector<1x8x32xf32> to vector<8x32xf32>
    %98 = vector.shape_cast %95 : vector<8x32xf32> to vector<1x8x32xf32>
    tpu.vector_store %arg10[%c0_37, %c24, %c0_38], %98 {strides = array<i32>} : memref<1x32x32xf32, #tpu.memory_space<vmem>>, vector<1x8x32xf32>,
    %99 = tpu.concatenate %72, %88 in 0 : vector<8x32xf32>, vector<8x32xf32> -> vector<16x32xf32>
    %100 = arith.truncf %99 : vector<16x32xf32> to vector<16x32xbf16>
    %cst_39 = arith.constant dense<0.000000e+00> : vector<16x256xf32>
    %101 = tpu.matmul %100, %18, %cst_39 {dimension_numbers = #tpu.dot_dimension_numbers<[1], [0], [0], [1], [0, 0, 1, 1], [], []>} : vector<16x32xbf16>, vector<32x256xbf16>, vector<16x256xf32> -> vector<16x256xf32>
    %102 = vector.extract_strided_slice %12 {offsets = [8, 0], sizes = [8, 128], strides = [1, 1]} : vector<32x128xf32> to vector<8x128xf32>
    %103 = vector.extract_strided_slice %101 {offsets = [0, 0], sizes = [8, 128], strides = [1, 1]} : vector<16x256xf32> to vector<8x128xf32>
    %104 = arith.addf %102, %103 : vector<8x128xf32>
    %105 = vector.extract_strided_slice %104 {offsets = [0, 0], sizes = [8, 96], strides = [1, 1]} : vector<8x128xf32> to vector<8x96xf32>
    %106 = arith.negf %105 : vector<8x96xf32>
    %107 = math.exp %106 : vector<8x96xf32>
    %cst_40 = arith.constant 1.000000e+00 : f32
    %108 = vector.broadcast %cst_40 : f32 to vector<8x96xf32>
    %109 = arith.addf %108, %107 : vector<8x96xf32>
    %110 = arith.divf %108, %109 : vector<8x96xf32>
    %111 = vector.extract_strided_slice %104 {offsets = [0, 96], sizes = [8, 32], strides = [1, 1]} : vector<8x128xf32> to vector<8x32xf32>
    %112 = math.tanh %111 : vector<8x32xf32>
    %113 = vector.extract_strided_slice %110 {offsets = [0, 32], sizes = [8, 32], strides = [1, 1]} : vector<8x96xf32> to vector<8x32xf32>
    %114 = arith.mulf %113, %75 : vector<8x32xf32>
    %115 = vector.extract_strided_slice %110 {offsets = [0, 0], sizes = [8, 32], strides = [1, 1]} : vector<8x96xf32> to vector<8x32xf32>
    %116 = arith.mulf %115, %112 : vector<8x32xf32>
    %117 = arith.addf %114, %116 : vector<8x32xf32>
    %118 = vector.extract_strided_slice %110 {offsets = [0, 64], sizes = [8, 32], strides = [1, 1]} : vector<8x96xf32> to vector<8x32xf32>
    %119 = math.tanh %117 : vector<8x32xf32>
    %120 = arith.mulf %118, %119 : vector<8x32xf32>
    %121 = vector.extract_strided_slice %17 {offsets = [16, 0], sizes = [8, 128], strides = [1, 1]} : vector<32x128xf32> to vector<8x128xf32>
    %122 = vector.extract_strided_slice %101 {offsets = [8, 128], sizes = [8, 128], strides = [1, 1]} : vector<16x256xf32> to vector<8x128xf32>
    %123 = arith.addf %121, %122 : vector<8x128xf32>
    %124 = vector.extract_strided_slice %123 {offsets = [0, 0], sizes = [8, 96], strides = [1, 1]} : vector<8x128xf32> to vector<8x96xf32>
    %125 = arith.negf %124 : vector<8x96xf32>
    %126 = math.exp %125 : vector<8x96xf32>
    %cst_41 = arith.constant 1.000000e+00 : f32
    %127 = vector.broadcast %cst_41 : f32 to vector<8x96xf32>
    %128 = arith.addf %127, %126 : vector<8x96xf32>
    %129 = arith.divf %127, %128 : vector<8x96xf32>
    %130 = vector.extract_strided_slice %123 {offsets = [0, 96], sizes = [8, 32], strides = [1, 1]} : vector<8x128xf32> to vector<8x32xf32>
    %131 = math.tanh %130 : vector<8x32xf32>
    %132 = vector.extract_strided_slice %129 {offsets = [0, 32], sizes = [8, 32], strides = [1, 1]} : vector<8x96xf32> to vector<8x32xf32>
    %133 = arith.mulf %132, %91 : vector<8x32xf32>
    %134 = vector.extract_strided_slice %129 {offsets = [0, 0], sizes = [8, 32], strides = [1, 1]} : vector<8x96xf32> to vector<8x32xf32>
    %135 = arith.mulf %134, %131 : vector<8x32xf32>
    %136 = arith.addf %133, %135 : vector<8x32xf32>
    %137 = vector.extract_strided_slice %129 {offsets = [0, 64], sizes = [8, 32], strides = [1, 1]} : vector<8x96xf32> to vector<8x32xf32>
    %138 = math.tanh %136 : vector<8x32xf32>
    %139 = arith.mulf %137, %138 : vector<8x32xf32>
    %c1_i32_42 = arith.constant 1 : i32
    %140 = arith.addi %19, %c1_i32_42 : i32
    %141 = vector.broadcast %140 : i32 to vector<8x1xi32>
    %142 = arith.cmpi slt, %141, %3 : vector<8x1xi32>
    %143 = vector.shape_cast %142 : vector<8x1xi1> to vector<8x1xi1>
    %144 = vector.broadcast %143 : vector<8x1xi1> to vector<8x32xi1>
    %145 = arith.select %144, %120, %72 : vector<8x32xi1>, vector<8x32xf32>
    %146 = vector.shape_cast %142 : vector<8x1xi1> to vector<8x1xi1>
    %147 = vector.broadcast %146 : vector<8x1xi1> to vector<8x32xi1>
    %148 = arith.select %147, %117, %75 : vector<8x32xi1>, vector<8x32xf32>
    %cst_43 = arith.constant 0.000000e+00 : f32
    %149 = vector.shape_cast %142 : vector<8x1xi1> to vector<8x1xi1>
    %150 = vector.broadcast %149 : vector<8x1xi1> to vector<8x32xi1>
    %151 = vector.broadcast %cst_43 : f32 to vector<8x32xf32>
    %152 = arith.select %150, %120, %151 : vector<8x32xi1>, vector<8x32xf32>
    %c0_44 = arith.constant 0 : index
    %c8 = arith.constant 8 : index
    %c0_45 = arith.constant 0 : index
    %153 = vector.load %arg9[%c0_44, %c8, %c0_45] : memref<1x32x32xf32, #tpu.memory_space<vmem>>, vector<1x8x32xf32>
    %154 = vector.shape_cast %153 : vector<1x8x32xf32> to vector<8x32xf32>
    %155 = vector.shape_cast %152 : vector<8x32xf32> to vector<1x8x32xf32>
    tpu.vector_store %arg9[%c0_44, %c8, %c0_45], %155 {strides = array<i32>} : memref<1x32x32xf32, #tpu.memory_space<vmem>>, vector<1x8x32xf32>,
    %c2_i32 = arith.constant 2 : i32
    %156 = arith.addi %21, %c2_i32 : i32
    %157 = vector.broadcast %156 : i32 to vector<8x1xi32>
    %158 = arith.cmpi slt, %157, %3 : vector<8x1xi32>
    %159 = vector.shape_cast %158 : vector<8x1xi1> to vector<8x1xi1>
    %160 = vector.broadcast %159 : vector<8x1xi1> to vector<8x32xi1>
    %161 = arith.select %160, %139, %88 : vector<8x32xi1>, vector<8x32xf32>
    %162 = vector.shape_cast %158 : vector<8x1xi1> to vector<8x1xi1>
    %163 = vector.broadcast %162 : vector<8x1xi1> to vector<8x32xi1>
    %164 = arith.select %163, %136, %91 : vector<8x32xi1>, vector<8x32xf32>
    %cst_46 = arith.constant 0.000000e+00 : f32
    %165 = vector.shape_cast %158 : vector<8x1xi1> to vector<8x1xi1>
    %166 = vector.broadcast %165 : vector<8x1xi1> to vector<8x32xi1>
    %167 = vector.broadcast %cst_46 : f32 to vector<8x32xf32>
    %168 = arith.select %166, %139, %167 : vector<8x32xi1>, vector<8x32xf32>
    %c0_47 = arith.constant 0 : index
    %c16 = arith.constant 16 : index
    %c0_48 = arith.constant 0 : index
    %169 = vector.load %arg10[%c0_47, %c16, %c0_48] : memref<1x32x32xf32, #tpu.memory_space<vmem>>, vector<1x8x32xf32>
    %170 = vector.shape_cast %169 : vector<1x8x32xf32> to vector<8x32xf32>
    %171 = vector.shape_cast %168 : vector<8x32xf32> to vector<1x8x32xf32>
    tpu.vector_store %arg10[%c0_47, %c16, %c0_48], %171 {strides = array<i32>} : memref<1x32x32xf32, #tpu.memory_space<vmem>>, vector<1x8x32xf32>,
    %172 = tpu.concatenate %145, %161 in 0 : vector<8x32xf32>, vector<8x32xf32> -> vector<16x32xf32>
    %173 = arith.truncf %172 : vector<16x32xf32> to vector<16x32xbf16>
    %cst_49 = arith.constant dense<0.000000e+00> : vector<16x256xf32>
    %174 = tpu.matmul %173, %18, %cst_49 {dimension_numbers = #tpu.dot_dimension_numbers<[1], [0], [0], [1], [0, 0, 1, 1], [], []>} : vector<16x32xbf16>, vector<32x256xbf16>, vector<16x256xf32> -> vector<16x256xf32>
    %175 = vector.extract_strided_slice %12 {offsets = [16, 0], sizes = [8, 128], strides = [1, 1]} : vector<32x128xf32> to vector<8x128xf32>
    %176 = vector.extract_strided_slice %174 {offsets = [0, 0], sizes = [8, 128], strides = [1, 1]} : vector<16x256xf32> to vector<8x128xf32>
    %177 = arith.addf %175, %176 : vector<8x128xf32>
    %178 = vector.extract_strided_slice %177 {offsets = [0, 0], sizes = [8, 96], strides = [1, 1]} : vector<8x128xf32> to vector<8x96xf32>
    %179 = arith.negf %178 : vector<8x96xf32>
    %180 = math.exp %179 : vector<8x96xf32>
    %cst_50 = arith.constant 1.000000e+00 : f32
    %181 = vector.broadcast %cst_50 : f32 to vector<8x96xf32>
    %182 = arith.addf %181, %180 : vector<8x96xf32>
    %183 = arith.divf %181, %182 : vector<8x96xf32>
    %184 = vector.extract_strided_slice %177 {offsets = [0, 96], sizes = [8, 32], strides = [1, 1]} : vector<8x128xf32> to vector<8x32xf32>
    %185 = math.tanh %184 : vector<8x32xf32>
    %186 = vector.extract_strided_slice %183 {offsets = [0, 32], sizes = [8, 32], strides = [1, 1]} : vector<8x96xf32> to vector<8x32xf32>
    %187 = arith.mulf %186, %148 : vector<8x32xf32>
    %188 = vector.extract_strided_slice %183 {offsets = [0, 0], sizes = [8, 32], strides = [1, 1]} : vector<8x96xf32> to vector<8x32xf32>
    %189 = arith.mulf %188, %185 : vector<8x32xf32>
    %190 = arith.addf %187, %189 : vector<8x32xf32>
    %191 = vector.extract_strided_slice %183 {offsets = [0, 64], sizes = [8, 32], strides = [1, 1]} : vector<8x96xf32> to vector<8x32xf32>
    %192 = math.tanh %190 : vector<8x32xf32>
    %193 = arith.mulf %191, %192 : vector<8x32xf32>
    %194 = vector.extract_strided_slice %17 {offsets = [8, 0], sizes = [8, 128], strides = [1, 1]} : vector<32x128xf32> to vector<8x128xf32>
    %195 = vector.extract_strided_slice %174 {offsets = [8, 128], sizes = [8, 128], strides = [1, 1]} : vector<16x256xf32> to vector<8x128xf32>
    %196 = arith.addf %194, %195 : vector<8x128xf32>
    %197 = vector.extract_strided_slice %196 {offsets = [0, 0], sizes = [8, 96], strides = [1, 1]} : vector<8x128xf32> to vector<8x96xf32>
    %198 = arith.negf %197 : vector<8x96xf32>
    %199 = math.exp %198 : vector<8x96xf32>
    %cst_51 = arith.constant 1.000000e+00 : f32
    %200 = vector.broadcast %cst_51 : f32 to vector<8x96xf32>
    %201 = arith.addf %200, %199 : vector<8x96xf32>
    %202 = arith.divf %200, %201 : vector<8x96xf32>
    %203 = vector.extract_strided_slice %196 {offsets = [0, 96], sizes = [8, 32], strides = [1, 1]} : vector<8x128xf32> to vector<8x32xf32>
    %204 = math.tanh %203 : vector<8x32xf32>
    %205 = vector.extract_strided_slice %202 {offsets = [0, 32], sizes = [8, 32], strides = [1, 1]} : vector<8x96xf32> to vector<8x32xf32>
    %206 = arith.mulf %205, %164 : vector<8x32xf32>
    %207 = vector.extract_strided_slice %202 {offsets = [0, 0], sizes = [8, 32], strides = [1, 1]} : vector<8x96xf32> to vector<8x32xf32>
    %208 = arith.mulf %207, %204 : vector<8x32xf32>
    %209 = arith.addf %206, %208 : vector<8x32xf32>
    %210 = vector.extract_strided_slice %202 {offsets = [0, 64], sizes = [8, 32], strides = [1, 1]} : vector<8x96xf32> to vector<8x32xf32>
    %211 = math.tanh %209 : vector<8x32xf32>
    %212 = arith.mulf %210, %211 : vector<8x32xf32>
    %c2_i32_52 = arith.constant 2 : i32
    %213 = arith.addi %19, %c2_i32_52 : i32
    %214 = vector.broadcast %213 : i32 to vector<8x1xi32>
    %215 = arith.cmpi slt, %214, %3 : vector<8x1xi32>
    %216 = vector.shape_cast %215 : vector<8x1xi1> to vector<8x1xi1>
    %217 = vector.broadcast %216 : vector<8x1xi1> to vector<8x32xi1>
    %218 = arith.select %217, %193, %145 : vector<8x32xi1>, vector<8x32xf32>
    %219 = vector.shape_cast %215 : vector<8x1xi1> to vector<8x1xi1>
    %220 = vector.broadcast %219 : vector<8x1xi1> to vector<8x32xi1>
    %221 = arith.select %220, %190, %148 : vector<8x32xi1>, vector<8x32xf32>
    %cst_53 = arith.constant 0.000000e+00 : f32
    %222 = vector.shape_cast %215 : vector<8x1xi1> to vector<8x1xi1>
    %223 = vector.broadcast %222 : vector<8x1xi1> to vector<8x32xi1>
    %224 = vector.broadcast %cst_53 : f32 to vector<8x32xf32>
    %225 = arith.select %223, %193, %224 : vector<8x32xi1>, vector<8x32xf32>
    %c0_54 = arith.constant 0 : index
    %c16_55 = arith.constant 16 : index
    %c0_56 = arith.constant 0 : index
    %226 = vector.load %arg9[%c0_54, %c16_55, %c0_56] : memref<1x32x32xf32, #tpu.memory_space<vmem>>, vector<1x8x32xf32>
    %227 = vector.shape_cast %226 : vector<1x8x32xf32> to vector<8x32xf32>
    %228 = vector.shape_cast %225 : vector<8x32xf32> to vector<1x8x32xf32>
    tpu.vector_store %arg9[%c0_54, %c16_55, %c0_56], %228 {strides = array<i32>} : memref<1x32x32xf32, #tpu.memory_space<vmem>>, vector<1x8x32xf32>,
    %c1_i32_57 = arith.constant 1 : i32
    %229 = arith.addi %21, %c1_i32_57 : i32
    %230 = vector.broadcast %229 : i32 to vector<8x1xi32>
    %231 = arith.cmpi slt, %230, %3 : vector<8x1xi32>
    %232 = vector.shape_cast %231 : vector<8x1xi1> to vector<8x1xi1>
    %233 = vector.broadcast %232 : vector<8x1xi1> to vector<8x32xi1>
    %234 = arith.select %233, %212, %161 : vector<8x32xi1>, vector<8x32xf32>
    %235 = vector.shape_cast %231 : vector<8x1xi1> to vector<8x1xi1>
    %236 = vector.broadcast %235 : vector<8x1xi1> to vector<8x32xi1>
    %237 = arith.select %236, %209, %164 : vector<8x32xi1>, vector<8x32xf32>
    %cst_58 = arith.constant 0.000000e+00 : f32
    %238 = vector.shape_cast %231 : vector<8x1xi1> to vector<8x1xi1>
    %239 = vector.broadcast %238 : vector<8x1xi1> to vector<8x32xi1>
    %240 = vector.broadcast %cst_58 : f32 to vector<8x32xf32>
    %241 = arith.select %239, %212, %240 : vector<8x32xi1>, vector<8x32xf32>
    %c0_59 = arith.constant 0 : index
    %c8_60 = arith.constant 8 : index
    %c0_61 = arith.constant 0 : index
    %242 = vector.load %arg10[%c0_59, %c8_60, %c0_61] : memref<1x32x32xf32, #tpu.memory_space<vmem>>, vector<1x8x32xf32>
    %243 = vector.shape_cast %242 : vector<1x8x32xf32> to vector<8x32xf32>
    %244 = vector.shape_cast %241 : vector<8x32xf32> to vector<1x8x32xf32>
    tpu.vector_store %arg10[%c0_59, %c8_60, %c0_61], %244 {strides = array<i32>} : memref<1x32x32xf32, #tpu.memory_space<vmem>>, vector<1x8x32xf32>,
    %245 = tpu.concatenate %218, %234 in 0 : vector<8x32xf32>, vector<8x32xf32> -> vector<16x32xf32>
    %246 = arith.truncf %245 : vector<16x32xf32> to vector<16x32xbf16>
    %cst_62 = arith.constant dense<0.000000e+00> : vector<16x256xf32>
    %247 = tpu.matmul %246, %18, %cst_62 {dimension_numbers = #tpu.dot_dimension_numbers<[1], [0], [0], [1], [0, 0, 1, 1], [], []>} : vector<16x32xbf16>, vector<32x256xbf16>, vector<16x256xf32> -> vector<16x256xf32>
    %248 = vector.extract_strided_slice %12 {offsets = [24, 0], sizes = [8, 128], strides = [1, 1]} : vector<32x128xf32> to vector<8x128xf32>
    %249 = vector.extract_strided_slice %247 {offsets = [0, 0], sizes = [8, 128], strides = [1, 1]} : vector<16x256xf32> to vector<8x128xf32>
    %250 = arith.addf %248, %249 : vector<8x128xf32>
    %251 = vector.extract_strided_slice %250 {offsets = [0, 0], sizes = [8, 96], strides = [1, 1]} : vector<8x128xf32> to vector<8x96xf32>
    %252 = arith.negf %251 : vector<8x96xf32>
    %253 = math.exp %252 : vector<8x96xf32>
    %cst_63 = arith.constant 1.000000e+00 : f32
    %254 = vector.broadcast %cst_63 : f32 to vector<8x96xf32>
    %255 = arith.addf %254, %253 : vector<8x96xf32>
    %256 = arith.divf %254, %255 : vector<8x96xf32>
    %257 = vector.extract_strided_slice %250 {offsets = [0, 96], sizes = [8, 32], strides = [1, 1]} : vector<8x128xf32> to vector<8x32xf32>
    %258 = math.tanh %257 : vector<8x32xf32>
    %259 = vector.extract_strided_slice %256 {offsets = [0, 32], sizes = [8, 32], strides = [1, 1]} : vector<8x96xf32> to vector<8x32xf32>
    %260 = arith.mulf %259, %221 : vector<8x32xf32>
    %261 = vector.extract_strided_slice %256 {offsets = [0, 0], sizes = [8, 32], strides = [1, 1]} : vector<8x96xf32> to vector<8x32xf32>
    %262 = arith.mulf %261, %258 : vector<8x32xf32>
    %263 = arith.addf %260, %262 : vector<8x32xf32>
    %264 = vector.extract_strided_slice %256 {offsets = [0, 64], sizes = [8, 32], strides = [1, 1]} : vector<8x96xf32> to vector<8x32xf32>
    %265 = math.tanh %263 : vector<8x32xf32>
    %266 = arith.mulf %264, %265 : vector<8x32xf32>
    %267 = vector.extract_strided_slice %17 {offsets = [0, 0], sizes = [8, 128], strides = [1, 1]} : vector<32x128xf32> to vector<8x128xf32>
    %268 = vector.extract_strided_slice %247 {offsets = [8, 128], sizes = [8, 128], strides = [1, 1]} : vector<16x256xf32> to vector<8x128xf32>
    %269 = arith.addf %267, %268 : vector<8x128xf32>
    %270 = vector.extract_strided_slice %269 {offsets = [0, 0], sizes = [8, 96], strides = [1, 1]} : vector<8x128xf32> to vector<8x96xf32>
    %271 = arith.negf %270 : vector<8x96xf32>
    %272 = math.exp %271 : vector<8x96xf32>
    %cst_64 = arith.constant 1.000000e+00 : f32
    %273 = vector.broadcast %cst_64 : f32 to vector<8x96xf32>
    %274 = arith.addf %273, %272 : vector<8x96xf32>
    %275 = arith.divf %273, %274 : vector<8x96xf32>
    %276 = vector.extract_strided_slice %269 {offsets = [0, 96], sizes = [8, 32], strides = [1, 1]} : vector<8x128xf32> to vector<8x32xf32>
    %277 = math.tanh %276 : vector<8x32xf32>
    %278 = vector.extract_strided_slice %275 {offsets = [0, 32], sizes = [8, 32], strides = [1, 1]} : vector<8x96xf32> to vector<8x32xf32>
    %279 = arith.mulf %278, %237 : vector<8x32xf32>
    %280 = vector.extract_strided_slice %275 {offsets = [0, 0], sizes = [8, 32], strides = [1, 1]} : vector<8x96xf32> to vector<8x32xf32>
    %281 = arith.mulf %280, %277 : vector<8x32xf32>
    %282 = arith.addf %279, %281 : vector<8x32xf32>
    %283 = vector.extract_strided_slice %275 {offsets = [0, 64], sizes = [8, 32], strides = [1, 1]} : vector<8x96xf32> to vector<8x32xf32>
    %284 = math.tanh %282 : vector<8x32xf32>
    %285 = arith.mulf %283, %284 : vector<8x32xf32>
    %c3_i32_65 = arith.constant 3 : i32
    %286 = arith.addi %19, %c3_i32_65 : i32
    %287 = vector.broadcast %286 : i32 to vector<8x1xi32>
    %288 = arith.cmpi slt, %287, %3 : vector<8x1xi32>
    %289 = vector.shape_cast %288 : vector<8x1xi1> to vector<8x1xi1>
    %290 = vector.broadcast %289 : vector<8x1xi1> to vector<8x32xi1>
    %291 = arith.select %290, %266, %218 : vector<8x32xi1>, vector<8x32xf32>
    %292 = vector.shape_cast %288 : vector<8x1xi1> to vector<8x1xi1>
    %293 = vector.broadcast %292 : vector<8x1xi1> to vector<8x32xi1>
    %294 = arith.select %293, %263, %221 : vector<8x32xi1>, vector<8x32xf32>
    %cst_66 = arith.constant 0.000000e+00 : f32
    %295 = vector.shape_cast %288 : vector<8x1xi1> to vector<8x1xi1>
    %296 = vector.broadcast %295 : vector<8x1xi1> to vector<8x32xi1>
    %297 = vector.broadcast %cst_66 : f32 to vector<8x32xf32>
    %298 = arith.select %296, %266, %297 : vector<8x32xi1>, vector<8x32xf32>
    %c0_67 = arith.constant 0 : index
    %c24_68 = arith.constant 24 : index
    %c0_69 = arith.constant 0 : index
    %299 = vector.load %arg9[%c0_67, %c24_68, %c0_69] : memref<1x32x32xf32, #tpu.memory_space<vmem>>, vector<1x8x32xf32>
    %300 = vector.shape_cast %299 : vector<1x8x32xf32> to vector<8x32xf32>
    %301 = vector.shape_cast %298 : vector<8x32xf32> to vector<1x8x32xf32>
    tpu.vector_store %arg9[%c0_67, %c24_68, %c0_69], %301 {strides = array<i32>} : memref<1x32x32xf32, #tpu.memory_space<vmem>>, vector<1x8x32xf32>,
    %c0_i32_70 = arith.constant 0 : i32
    %302 = arith.addi %21, %c0_i32_70 : i32
    %303 = vector.broadcast %302 : i32 to vector<8x1xi32>
    %304 = arith.cmpi slt, %303, %3 : vector<8x1xi32>
    %305 = vector.shape_cast %304 : vector<8x1xi1> to vector<8x1xi1>
    %306 = vector.broadcast %305 : vector<8x1xi1> to vector<8x32xi1>
    %307 = arith.select %306, %285, %234 : vector<8x32xi1>, vector<8x32xf32>
    %308 = vector.shape_cast %304 : vector<8x1xi1> to vector<8x1xi1>
    %309 = vector.broadcast %308 : vector<8x1xi1> to vector<8x32xi1>
    %310 = arith.select %309, %282, %237 : vector<8x32xi1>, vector<8x32xf32>
    %cst_71 = arith.constant 0.000000e+00 : f32
    %311 = vector.shape_cast %304 : vector<8x1xi1> to vector<8x1xi1>
    %312 = vector.broadcast %311 : vector<8x1xi1> to vector<8x32xi1>
    %313 = vector.broadcast %cst_71 : f32 to vector<8x32xf32>
    %314 = arith.select %312, %285, %313 : vector<8x32xi1>, vector<8x32xf32>
    %c0_72 = arith.constant 0 : index
    %c0_73 = arith.constant 0 : index
    %c0_74 = arith.constant 0 : index
    %315 = vector.load %arg10[%c0_72, %c0_73, %c0_74] : memref<1x32x32xf32, #tpu.memory_space<vmem>>, vector<1x8x32xf32>
    %316 = vector.shape_cast %315 : vector<1x8x32xf32> to vector<8x32xf32>
    %317 = vector.shape_cast %314 : vector<8x32xf32> to vector<1x8x32xf32>
    tpu.vector_store %arg10[%c0_72, %c0_73, %c0_74], %317 {strides = array<i32>} : memref<1x32x32xf32, #tpu.memory_space<vmem>>, vector<1x8x32xf32>,
    %c0_75 = arith.constant 0 : index
    %c0_76 = arith.constant 0 : index
    %318 = vector.load %arg12[%c0_75, %c0_76] : memref<8x32xf32, #tpu.memory_space<vmem>>, vector<8x32xf32>
    tpu.vector_store %arg12[%c0_75, %c0_76], %291 {strides = array<i32>} : memref<8x32xf32, #tpu.memory_space<vmem>>, vector<8x32xf32>,
    %c0_77 = arith.constant 0 : index
    %c0_78 = arith.constant 0 : index
    %319 = vector.load %arg13[%c0_77, %c0_78] : memref<8x32xf32, #tpu.memory_space<vmem>>, vector<8x32xf32>
    tpu.vector_store %arg13[%c0_77, %c0_78], %294 {strides = array<i32>} : memref<8x32xf32, #tpu.memory_space<vmem>>, vector<8x32xf32>,
    %c0_79 = arith.constant 0 : index
    %c0_80 = arith.constant 0 : index
    %320 = vector.load %arg14[%c0_79, %c0_80] : memref<8x32xf32, #tpu.memory_space<vmem>>, vector<8x32xf32>
    tpu.vector_store %arg14[%c0_79, %c0_80], %307 {strides = array<i32>} : memref<8x32xf32, #tpu.memory_space<vmem>>, vector<8x32xf32>,
    %c0_81 = arith.constant 0 : index
    %c0_82 = arith.constant 0 : index
    %321 = vector.load %arg15[%c0_81, %c0_82] : memref<8x32xf32, #tpu.memory_space<vmem>>, vector<8x32xf32>
    tpu.vector_store %arg15[%c0_81, %c0_82], %310 {strides = array<i32>} : memref<8x32xf32, #tpu.memory_space<vmem>>, vector<8x32xf32>,
    %c1_i32_83 = arith.constant 1 : i32
    %322 = arith.cmpi eq, %arg0, %c1_i32_83 : i32
    %323 = arith.extui %322 : i1 to i32
    %c0_i32_84 = arith.constant 0 : i32
    %324 = arith.cmpi ne, %323, %c0_i32_84 : i32
    scf.if %324 {
      %c0_85 = arith.constant 0 : index
      %c0_86 = arith.constant 0 : index
      %325 = vector.load %arg11[%c0_85, %c0_86] : memref<8x64xf32, #tpu.memory_space<vmem>>, vector<8x32xf32>
      tpu.vector_store %arg11[%c0_85, %c0_86], %291 {strides = array<i32>} : memref<8x64xf32, #tpu.memory_space<vmem>>, vector<8x32xf32>,
      %c0_87 = arith.constant 0 : index
      %c32 = arith.constant 32 : index
      %326 = vector.load %arg11[%c0_87, %c32] : memref<8x64xf32, #tpu.memory_space<vmem>>, vector<8x32xf32>
      tpu.vector_store %arg11[%c0_87, %c32], %307 {strides = array<i32>} : memref<8x64xf32, #tpu.memory_space<vmem>>, vector<8x32xf32>,
    } else {
    }
    return
  }
  func.func @transform_0(%arg0: i32) -> (i32, i32, i32) {
    %c0_i32 = arith.constant 0 : i32
    %c0_i32_0 = arith.constant 0 : i32
    %c0_i32_1 = arith.constant 0 : i32
    return %arg0, %c0_i32, %c0_i32_0 : i32, i32, i32
  }
  func.func @transform_1(%arg0: i32) -> (i32, i32, i32) {
    %c1_i32 = arith.constant 1 : i32
    %0 = arith.subi %c1_i32, %arg0 : i32
    %c0_i32 = arith.constant 0 : i32
    %c0_i32_0 = arith.constant 0 : i32
    %c0_i32_1 = arith.constant 0 : i32
    return %0, %c0_i32, %c0_i32_0 : i32, i32, i32
  }
  func.func @transform_2(%arg0: i32) -> (i32, i32) {
    %c0_i32 = arith.constant 0 : i32
    %c0_i32_0 = arith.constant 0 : i32
    %c0_i32_1 = arith.constant 0 : i32
    return %c0_i32, %c0_i32_0 : i32, i32
  }
  func.func @transform_3(%arg0: i32) -> (i32, i32) {
    %c0_i32 = arith.constant 0 : i32
    %c0_i32_0 = arith.constant 0 : i32
    %c0_i32_1 = arith.constant 0 : i32
    return %c0_i32, %c0_i32_0 : i32, i32
  }
  func.func @transform_4(%arg0: i32) -> (i32, i32) {
    %c0_i32 = arith.constant 0 : i32
    %c0_i32_0 = arith.constant 0 : i32
    %c0_i32_1 = arith.constant 0 : i32
    return %c0_i32, %c0_i32_0 : i32, i32
  }
  func.func @transform_5(%arg0: i32) -> (i32, i32) {
    %c0_i32 = arith.constant 0 : i32
    %c0_i32_0 = arith.constant 0 : i32
    %c0_i32_1 = arith.constant 0 : i32
    return %c0_i32, %c0_i32_0 : i32, i32
  }
  func.func @transform_6(%arg0: i32) -> (i32, i32) {
    %c0_i32 = arith.constant 0 : i32
    %c0_i32_0 = arith.constant 0 : i32
    %c0_i32_1 = arith.constant 0 : i32
    return %c0_i32, %c0_i32_0 : i32, i32
  }
  func.func @transform_7(%arg0: i32) -> (i32, i32) {
    %c0_i32 = arith.constant 0 : i32
    %c0_i32_0 = arith.constant 0 : i32
    %c0_i32_1 = arith.constant 0 : i32
    return %c0_i32, %c0_i32_0 : i32, i32
  }
  func.func @transform_8(%arg0: i32) -> (i32, i32, i32) {
    %c0_i32 = arith.constant 0 : i32
    %c0_i32_0 = arith.constant 0 : i32
    %c0_i32_1 = arith.constant 0 : i32
    return %arg0, %c0_i32, %c0_i32_0 : i32, i32, i32
  }
  func.func @transform_9(%arg0: i32) -> (i32, i32, i32) {
    %c1_i32 = arith.constant 1 : i32
    %0 = arith.subi %c1_i32, %arg0 : i32
    %c0_i32 = arith.constant 0 : i32
    %c0_i32_0 = arith.constant 0 : i32
    %c0_i32_1 = arith.constant 0 : i32
    return %0, %c0_i32, %c0_i32_0 : i32, i32, i32
  }
  func.func @transform_10(%arg0: i32) -> (i32, i32) {
    %c0_i32 = arith.constant 0 : i32
    %c0_i32_0 = arith.constant 0 : i32
    %c0_i32_1 = arith.constant 0 : i32
    return %c0_i32, %c0_i32_0 : i32, i32
  }
}

</mosaic_0001>

<llo_original>
// kernel: tpu_custom_call.1
$region0: #{tpu_custom_call.1}
  #allocation0 [shape = 'u32[]', space=smem, size = 0x4, offset = 0x4, fixed_abs, tag = 'smem constant byte address 0x4 - core index']
  #allocation1 [shape = 'u32[144,128]{1,0:T(1,128)}', space=vmem, size = 0x12000, scoped, tag = 'internal scratch']
  #allocation2 [shape = 'f32[8,32]{1,0:T(8,128)}', space=vmem, size = 0x1000, scoped, tag = 'scratch operand']
  #allocation3 [shape = 'f32[8,32]{1,0:T(8,128)}', space=vmem, size = 0x1000, scoped, tag = 'scratch operand']
  #allocation4 [shape = 'f32[8,32]{1,0:T(8,128)}', space=vmem, size = 0x1000, scoped, tag = 'scratch operand']
  #allocation5 [shape = 'f32[8,32]{1,0:T(8,128)}', space=vmem, size = 0x1000, scoped, tag = 'scratch operand']
  %s0 = inlined_call_operand.hbm [shape: bf16[2,32,32], index: 0, kind: input, shape index: {}]
  %s1 = inlined_call_operand.hbm [shape: bf16[2,32,32], index: 1, kind: input, shape index: {}]
  %s2 = inlined_call_operand.vmem [shape: s32[8,1], index: 2, kind: input, shape index: {}]
  %s3 = inlined_call_operand.vmem [shape: bf16[32,128], index: 3, kind: input, shape index: {}]
  %s4 = inlined_call_operand.hbm [shape: bf16[32,128], index: 4, kind: input, shape index: {}]
  %s5 = inlined_call_operand.hbm [shape: bf16[32,256], index: 5, kind: input, shape index: {}]
  %s6 = inlined_call_operand.vmem [shape: f32[1,128], index: 6, kind: input, shape index: {}]
  %s7 = inlined_call_operand.vmem [shape: f32[1,128], index: 7, kind: input, shape index: {}]
  %s8 = inlined_call_operand.hbm [shape: f32[2,32,32], index: 8, kind: output, shape index: {0}]
  %s9 = inlined_call_operand.hbm [shape: f32[2,32,32], index: 9, kind: output, shape index: {1}]
  %s10 = inlined_call_operand.hbm [shape: f32[8,64], index: 10, kind: output, shape index: {2}]
  %11 = xla_tuple %s8, %s9, %s10
  %s12 = sld [smem:[#allocation0]]
  $region105: #{tpu_custom_call.1} parent=0
    _
  %s14 = ssub.s32 1, %s12
  %s15 = scalar_select 0, %s14, %s12
  $region1: #{tpu_custom_call.1} parent=0
    #allocation6 [shape = 'u8[16384]{0}', space=vmem, size = 0x4000, scoped, tag = 'input window, operand 0']
    #allocation7 [shape = 's32[2]{0}', space=sflag, size = 0x8, scoped, tag = 'scoped memory for tpu_custom_call.1']
    #allocation8 [shape = 's32[2]{0}', space=sflag, size = 0x8, scoped, tag = 'scoped memory for tpu_custom_call.1']
    #allocation9 [shape = 'u8[16384]{0}', space=vmem, size = 0x4000, scoped, tag = 'input window, operand 1']
    #allocation10 [shape = 's32[2]{0}', space=sflag, size = 0x8, scoped, tag = 'scoped memory for tpu_custom_call.1']
    #allocation11 [shape = 'u8[8192]{0}', space=vmem, size = 0x2000, scoped, tag = 'input window, operand 4, single buffered']
    #allocation12 [shape = 'u8[16384]{0}', space=vmem, size = 0x4000, scoped, tag = 'input window, operand 5, single buffered']
    #allocation13 [shape = 's32[1]{0}', space=sflag, size = 0x4, scoped, tag = 'scoped memory for tpu_custom_call.1']
    #allocation14 [shape = 'u8[32768]{0}', space=vmem, size = 0x8000, scoped, tag = 'output window, operand 0']
    #allocation15 [shape = 'u8[32768]{0}', space=vmem, size = 0x8000, scoped, tag = 'output window, operand 1']
    #allocation16 [shape = 's32[2]{0}', space=sflag, size = 0x8, scoped, tag = 'scoped memory for tpu_custom_call.1']
    #allocation17 [shape = 'u8[4096]{0}', space=vmem, size = 0x1000, scoped, tag = 'output window, operand 2, single buffered']
    %16 = vsyncpa [#allocation7], 0
    %s17 = scalar_lea.sflag [#allocation7], 1
    %18 = vsyncpa %s17, 0
    %19 = vsyncpa [#allocation10], 0
    %s20 = scalar_lea.sflag [#allocation10], 1
    %21 = vsyncpa %s20, 0
    %22 = vsyncpa [#allocation13], 0
    %23 = vsyncpa [#allocation8], 0
    %s24 = scalar_lea.sflag [#allocation8], 1
    %25 = vsyncpa %s24, 0
    %26 = vsyncpa [#allocation16], 0
    %s27 = scalar_lea.sflag [#allocation16], 1
    %28 = vsyncpa %s27, 0
    loop: start=0, step=1, limit=4
    $region2: #{tpu_custom_call.1} parent=1 // loop_pre_header
      _
    $region3: #{tpu_custom_call.1} parent=1 // loop_header
      %s30 = sphi 0, %s34
      %p31 = scmp.ge.s32.totalorder %s30, 4
      %s40 = sphi 0, %s42
      %s43 = sphi 0, %s40
      %s44 = sphi 0, %s43
      %s60 = sphi 0, %s44
      %s68 = sphi 0, %s70
      %s71 = sphi 0, %s68
      %s72 = sphi 0, %s71
      %s88 = sphi 0, %s72
      %s92 = sphi 0, %s92
      %s94 = sphi 0, %s92
      %s95 = sphi 0, %s94
      %s109 = sphi 0, %s95
      %s113 = sphi 0, %s113
      %s115 = sphi 0, %s113
      %s116 = sphi 0, %s115
      %s130 = sphi 0, %s116
      %s134 = sphi 0, %s134
      %s136 = sphi 0, %s134
      %s137 = sphi 0, %s136
      %s151 = sphi 0, %s137
      %s155 = sphi 0, %s155
      %s157 = sphi 0, %s155
      %s158 = sphi 0, %s157
      %s172 = sphi 0, %s158
      %s176 = sphi 0, %s176
      %s178 = sphi 0, %s176
      %s179 = sphi 0, %s178
      %s193 = sphi 0, %s179
      %s197 = sphi 0, %s197
      %s199 = sphi 0, %s197
      %s200 = sphi 0, %s199
      %s214 = sphi 0, %s200
      %s220 = sphi 0, %s222
      %s223 = sphi 0, %s220
      %s224 = sphi 0, %s223
      %s240 = sphi 0, %s224
      %s248 = sphi 0, %s250
      %s251 = sphi 0, %s248
      %s252 = sphi 0, %s251
      %s268 = sphi 0, %s252
      %s272 = sphi 0, %s272
      %s274 = sphi 0, %s272
      %s275 = sphi 0, %s274
      %s289 = sphi 0, %s275
    $region4: #{tpu_custom_call.1} parent=1 // loop_header_branch
      %33 = sbr.rel (%p31) target = $region8
    $region5: #{tpu_custom_call.1} parent=1 // loop_body
      %s35 = ssub.s32 %s30, 1
      %s36 = ssub.s32 %s30, 2
      %s37 = sadd.s32 %s30, 1
      %s38 = ssub.s32 %s30, %s37
      %p39 = scmp.eq.s32.totalorder %s38, 0
      %s41 = sadd.s32 %s40, 1
      %s42 = scalar_select %p39, %s40, %s41
      %p45 = pneg %p39
      %p46 = scmp.eq.s32.totalorder %s30, 1
      %p47 = por %p45, %p46
      %p48 = scmp.ne.s32.totalorder %s40, %s43
      %p49 = scmp.eq.s32.totalorder %s30, 0
      %p50 = por %p48, %p49
      %p51 = scmp.ne.s32.totalorder %s40, %s43
      %p52 = scmp.eq.s32.totalorder %s35, 1
      %p53 = por %p51, %p52
      %p54 = scmp.ne.s32.totalorder %s43, %s44
      %p55 = scmp.eq.s32.totalorder %s35, 0
      %p56 = por %p54, %p55
      %p57 = scmp.ne.s32.totalorder %s43, %s44
      %p58 = scmp.eq.s32.totalorder %s36, 1
      %p59 = por %p57, %p58
      %p61 = scmp.ne.s32.totalorder %s44, %s60
      %p62 = scmp.eq.s32.totalorder %s36, 0
      %p63 = por %p61, %p62
      %s64 = ssub.s32 1, %s30
      %s65 = ssub.s32 1, %s37
      %s66 = ssub.s32 %s64, %s65
      %p67 = scmp.eq.s32.totalorder %s66, 0
      %s69 = sadd.s32 %s68, 1
      %s70 = scalar_select %p67, %s68, %s69
      %p73 = pneg %p67
      %p74 = scmp.eq.s32.totalorder %s30, 1
      %p75 = por %p73, %p74
      %p76 = scmp.ne.s32.totalorder %s68, %s71
      %p77 = scmp.eq.s32.totalorder %s30, 0
      %p78 = por %p76, %p77
      %p79 = scmp.ne.s32.totalorder %s68, %s71
      %p80 = scmp.eq.s32.totalorder %s35, 1
      %p81 = por %p79, %p80
      %p82 = scmp.ne.s32.totalorder %s71, %s72
      %p83 = scmp.eq.s32.totalorder %s35, 0
      %p84 = por %p82, %p83
      %p85 = scmp.ne.s32.totalorder %s71, %s72
      %p86 = scmp.eq.s32.totalorder %s36, 1
      %p87 = por %p85, %p86
      %p89 = scmp.ne.s32.totalorder %s72, %s88
      %p90 = scmp.eq.s32.totalorder %s36, 0
      %p91 = por %p89, %p90
      %s93 = sadd.s32 %s92, 1
      %p96 = scmp.eq.s32.totalorder %s30, 1
      %p97 = scmp.ne.s32.totalorder %s92, %s94
      %p98 = scmp.eq.s32.totalorder %s30, 0
      %p99 = por %p97, %p98
      %p100 = scmp.ne.s32.totalorder %s92, %s94
      %p101 = scmp.eq.s32.totalorder %s35, 1
      %p102 = por %p100, %p101
      %p103 = scmp.ne.s32.totalorder %s94, %s95
      %p104 = scmp.eq.s32.totalorder %s35, 0
      %p105 = por %p103, %p104
      %p106 = scmp.ne.s32.totalorder %s94, %s95
      %p107 = scmp.eq.s32.totalorder %s36, 1
      %p108 = por %p106, %p107
      %p110 = scmp.ne.s32.totalorder %s95, %s109
      %p111 = scmp.eq.s32.totalorder %s36, 0
      %p112 = por %p110, %p111
      %s114 = sadd.s32 %s113, 1
      %p117 = scmp.eq.s32.totalorder %s30, 1
      %p118 = scmp.ne.s32.totalorder %s113, %s115
      %p119 = scmp.eq.s32.totalorder %s30, 0
      %p120 = por %p118, %p119
      %p121 = scmp.ne.s32.totalorder %s113, %s115
      %p122 = scmp.eq.s32.totalorder %s35, 1
      %p123 = por %p121, %p122
      %p124 = scmp.ne.s32.totalorder %s115, %s116
      %p125 = scmp.eq.s32.totalorder %s35, 0
      %p126 = por %p124, %p125
      %p127 = scmp.ne.s32.totalorder %s115, %s116
      %p128 = scmp.eq.s32.totalorder %s36, 1
      %p129 = por %p127, %p128
      %p131 = scmp.ne.s32.totalorder %s116, %s130
      %p132 = scmp.eq.s32.totalorder %s36, 0
      %p133 = por %p131, %p132
      %s135 = sadd.s32 %s134, 1
      %p138 = scmp.eq.s32.totalorder %s30, 1
      %p139 = scmp.ne.s32.totalorder %s134, %s136
      %p140 = scmp.eq.s32.totalorder %s30, 0
      %p141 = por %p139, %p140
      %p142 = scmp.ne.s32.totalorder %s134, %s136
      %p143 = scmp.eq.s32.totalorder %s35, 1
      %p144 = por %p142, %p143
      %p145 = scmp.ne.s32.totalorder %s136, %s137
      %p146 = scmp.eq.s32.totalorder %s35, 0
      %p147 = por %p145, %p146
      %p148 = scmp.ne.s32.totalorder %s136, %s137
      %p149 = scmp.eq.s32.totalorder %s36, 1
      %p150 = por %p148, %p149
      %p152 = scmp.ne.s32.totalorder %s137, %s151
      %p153 = scmp.eq.s32.totalorder %s36, 0
      %p154 = por %p152, %p153
      %s156 = sadd.s32 %s155, 1
      %p159 = scmp.eq.s32.totalorder %s30, 1
      %p160 = scmp.ne.s32.totalorder %s155, %s157
      %p161 = scmp.eq.s32.totalorder %s30, 0
      %p162 = por %p160, %p161
      %p163 = scmp.ne.s32.totalorder %s155, %s157
      %p164 = scmp.eq.s32.totalorder %s35, 1
      %p165 = por %p163, %p164
      %p166 = scmp.ne.s32.totalorder %s157, %s158
      %p167 = scmp.eq.s32.totalorder %s35, 0
      %p168 = por %p166, %p167
      %p169 = scmp.ne.s32.totalorder %s157, %s158
      %p170 = scmp.eq.s32.totalorder %s36, 1
      %p171 = por %p169, %p170
      %p173 = scmp.ne.s32.totalorder %s158, %s172
      %p174 = scmp.eq.s32.totalorder %s36, 0
      %p175 = por %p173, %p174
      %s177 = sadd.s32 %s176, 1
      %p180 = scmp.eq.s32.totalorder %s30, 1
      %p181 = scmp.ne.s32.totalorder %s176, %s178
      %p182 = scmp.eq.s32.totalorder %s30, 0
      %p183 = por %p181, %p182
      %p184 = scmp.ne.s32.totalorder %s176, %s178
      %p185 = scmp.eq.s32.totalorder %s35, 1
      %p186 = por %p184, %p185
      %p187 = scmp.ne.s32.totalorder %s178, %s179
      %p188 = scmp.eq.s32.totalorder %s35, 0
      %p189 = por %p187, %p188
      %p190 = scmp.ne.s32.totalorder %s178, %s179
      %p191 = scmp.eq.s32.totalorder %s36, 1
      %p192 = por %p190, %p191
      %p194 = scmp.ne.s32.totalorder %s179, %s193
      %p195 = scmp.eq.s32.totalorder %s36, 0
      %p196 = por %p194, %p195
      %s198 = sadd.s32 %s197, 1
      %p201 = scmp.eq.s32.totalorder %s30, 1
      %p202 = scmp.ne.s32.totalorder %s197, %s199
      %p203 = scmp.eq.s32.totalorder %s30, 0
      %p204 = por %p202, %p203
      %p205 = scmp.ne.s32.totalorder %s197, %s199
      %p206 = scmp.eq.s32.totalorder %s35, 1
      %p207 = por %p205, %p206
      %p208 = scmp.ne.s32.totalorder %s199, %s200
      %p209 = scmp.eq.s32.totalorder %s35, 0
      %p210 = por %p208, %p209
      %p211 = scmp.ne.s32.totalorder %s199, %s200
      %p212 = scmp.eq.s32.totalorder %s36, 1
      %p213 = por %p211, %p212
      %p215 = scmp.ne.s32.totalorder %s200, %s214
      %p216 = scmp.eq.s32.totalorder %s36, 0
      %p217 = por %p215, %p216
      %s218 = ssub.s32 %s30, %s37
      %p219 = scmp.eq.s32.totalorder %s218, 0
      %s221 = sadd.s32 %s220, 1
      %s222 = scalar_select %p219, %s220, %s221
      %p225 = pneg %p219
      %p226 = scmp.eq.s32.totalorder %s30, 1
      %p227 = por %p225, %p226
      %p228 = scmp.ne.s32.totalorder %s220, %s223
      %p229 = scmp.eq.s32.totalorder %s30, 0
      %p230 = por %p228, %p229
      %p231 = scmp.ne.s32.totalorder %s220, %s223
      %p232 = scmp.eq.s32.totalorder %s35, 1
      %p233 = por %p231, %p232
      %p234 = scmp.ne.s32.totalorder %s223, %s224
      %p235 = scmp.eq.s32.totalorder %s35, 0
      %p236 = por %p234, %p235
      %p237 = scmp.ne.s32.totalorder %s223, %s224
      %p238 = scmp.eq.s32.totalorder %s36, 1
      %p239 = por %p237, %p238
      %p241 = scmp.ne.s32.totalorder %s224, %s240
      %p242 = scmp.eq.s32.totalorder %s36, 0
      %p243 = por %p241, %p242
      %s244 = ssub.s32 1, %s30
      %s245 = ssub.s32 1, %s37
      %s246 = ssub.s32 %s244, %s245
      %p247 = scmp.eq.s32.totalorder %s246, 0
      %s249 = sadd.s32 %s248, 1
      %s250 = scalar_select %p247, %s248, %s249
      %p253 = pneg %p247
      %p254 = scmp.eq.s32.totalorder %s30, 1
      %p255 = por %p253, %p254
      %p256 = scmp.ne.s32.totalorder %s248, %s251
      %p257 = scmp.eq.s32.totalorder %s30, 0
      %p258 = por %p256, %p257
      %p259 = scmp.ne.s32.totalorder %s248, %s251
      %p260 = scmp.eq.s32.totalorder %s35, 1
      %p261 = por %p259, %p260
      %p262 = scmp.ne.s32.totalorder %s251, %s252
      %p263 = scmp.eq.s32.totalorder %s35, 0
      %p264 = por %p262, %p263
      %p265 = scmp.ne.s32.totalorder %s251, %s252
      %p266 = scmp.eq.s32.totalorder %s36, 1
      %p267 = por %p265, %p266
      %p269 = scmp.ne.s32.totalorder %s252, %s268
      %p270 = scmp.eq.s32.totalorder %s36, 0
      %p271 = por %p269, %p270
      %s273 = sadd.s32 %s272, 1
      %p276 = scmp.eq.s32.totalorder %s30, 1
      %p277 = scmp.ne.s32.totalorder %s272, %s274
      %p278 = scmp.eq.s32.totalorder %s30, 0
      %p279 = por %p277, %p278
      %p280 = scmp.ne.s32.totalorder %s272, %s274
      %p281 = scmp.eq.s32.totalorder %s35, 1
      %p282 = por %p280, %p281
      %p283 = scmp.ne.s32.totalorder %s274, %s275
      %p284 = scmp.eq.s32.totalorder %s35, 0
      %p285 = por %p283, %p284
      %p286 = scmp.ne.s32.totalorder %s274, %s275
      %p287 = scmp.eq.s32.totalorder %s36, 1
      %p288 = por %p286, %p287
      %p290 = scmp.ne.s32.totalorder %s275, %s289
      %p291 = scmp.eq.s32.totalorder %s36, 0
      %p292 = por %p290, %p291
      %p293 = scmp.le.s32.totalorder 1, %s30
      %p294 = scmp.lt.s32.totalorder %s30, 3
      %p295 = pnand %p293, %p294
      %p296 = pneg %p295
      // Predicated region
      $region9: #{tpu_custom_call.1} parent=5 // pred_check
        _
      $region10: #{tpu_custom_call.1} parent=5 // pred_check_branch
        %298 = sbr.rel (%p295) target = $region12
      $region11: #{tpu_custom_call.1} parent=5 // pred_region
        %s299 = ssub.s32 %s30, 1
        // Predicated region
        $region13: #{tpu_custom_call.1} parent=11 // pred_check
          %p300 = pneg %p105
        $region14: #{tpu_custom_call.1} parent=11 // pred_check_branch
          %302 = sbr.rel (%p300) target = $region16
        $region15: #{tpu_custom_call.1} parent=11 // pred_region
          _
        $region16: #{tpu_custom_call.1} parent=11 // pred_fallthru
          _
        // Predicated region
        $region17: #{tpu_custom_call.1} parent=11 // pred_check
          %p303 = pneg %p126
        $region18: #{tpu_custom_call.1} parent=11 // pred_check_branch
          %305 = sbr.rel (%p303) target = $region20
        $region19: #{tpu_custom_call.1} parent=11 // pred_region
          _
        $region20: #{tpu_custom_call.1} parent=11 // pred_fallthru
          _
        // Predicated region
        $region21: #{tpu_custom_call.1} parent=11 // pred_check
          %p306 = pneg %p147
        $region22: #{tpu_custom_call.1} parent=11 // pred_check_branch
          %308 = sbr.rel (%p306) target = $region24
        $region23: #{tpu_custom_call.1} parent=11 // pred_region
          %s310 = ssub.s32 256, 256
          %311 = vsyncadd [#allocation10], %s310
          %s312 = sshll.u32 [#allocation11], 4
          %s313 = int_to_ptr.vmem [resolvable:$true] %s312
          %318 = dma.hbm_to_vmem [thread:$0]  %s4, 256, %s313, [#allocation10], 64, 64, 4
        $region24: #{tpu_custom_call.1} parent=11 // pred_fallthru
          _
        // Predicated region
        $region25: #{tpu_custom_call.1} parent=11 // pred_check
          %p319 = pneg %p168
        $region26: #{tpu_custom_call.1} parent=11 // pred_check_branch
          %321 = sbr.rel (%p319) target = $region28
        $region27: #{tpu_custom_call.1} parent=11 // pred_region
          %s323 = ssub.s32 512, 512
          %324 = vsyncadd [#allocation13], %s323
          %s325 = sshll.u32 [#allocation12], 4
          %s326 = int_to_ptr.vmem [resolvable:$true] %s325
          %331 = dma.hbm_to_vmem [thread:$0]  %s5, 512, %s326, [#allocation13], 128, 128, 8
        $region28: #{tpu_custom_call.1} parent=11 // pred_fallthru
          _
        // Predicated region
        $region29: #{tpu_custom_call.1} parent=11 // pred_check
          %p332 = pneg %p189
        $region30: #{tpu_custom_call.1} parent=11 // pred_check_branch
          %334 = sbr.rel (%p332) target = $region32
        $region31: #{tpu_custom_call.1} parent=11 // pred_region
          _
        $region32: #{tpu_custom_call.1} parent=11 // pred_fallthru
          _
        // Predicated region
        $region33: #{tpu_custom_call.1} parent=11 // pred_check
          %p335 = pneg %p210
        $region34: #{tpu_custom_call.1} parent=11 // pred_check_branch
          %337 = sbr.rel (%p335) target = $region36
        $region35: #{tpu_custom_call.1} parent=11 // pred_region
          _
        $region36: #{tpu_custom_call.1} parent=11 // pred_fallthru
          _
      $region12: #{tpu_custom_call.1} parent=5 // pred_fallthru
        _
      %p338 = scmp.lt.s32.totalorder %s30, 2
      // Predicated region
      $region37: #{tpu_custom_call.1} parent=5 // pred_check
        %p339 = pneg %p338
      $region38: #{tpu_custom_call.1} parent=5 // pred_check_branch
        %341 = sbr.rel (%p339) target = $region40
      $region39: #{tpu_custom_call.1} parent=5 // pred_region
        // Predicated region
        $region41: #{tpu_custom_call.1} parent=39 // pred_check
          %p342 = pneg %p50
        $region42: #{tpu_custom_call.1} parent=39 // pred_check_branch
          %344 = sbr.rel (%p342) target = $region44
        $region43: #{tpu_custom_call.1} parent=39 // pred_region
          %s345 = sand.u32 %s40, 1
          %s346 = scalar_lea.sflag [#allocation7], %s345
          %s347 = sand.u32 %s40, 1
          %s348 = smul.addr %s347, 16
          %s349 = scalar_lea.vmem [#allocation6], %s348
          %s351 = ssub.s32 256, 256
          %352 = vsyncadd %s346, %s351
          %s353 = smul.addr %s30, 4
          %s354 = smul.addr %s353, 64
          %s355 = scalar_lea.hbm %s0, %s354
          %s356 = sshll.u32 %s349, 4
          %s357 = int_to_ptr.vmem [resolvable:$true] %s356
          %362 = dma.hbm_to_vmem [thread:$0]  %s355, 256, %s357, %s346, 64, 64, 4
        $region44: #{tpu_custom_call.1} parent=39 // pred_fallthru
          _
        // Predicated region
        $region45: #{tpu_custom_call.1} parent=39 // pred_check
          %p363 = pneg %p78
        $region46: #{tpu_custom_call.1} parent=39 // pred_check_branch
          %365 = sbr.rel (%p363) target = $region48
        $region47: #{tpu_custom_call.1} parent=39 // pred_region
          %s366 = sand.u32 %s30, 1
          %s367 = scalar_lea.sflag [#allocation10], %s366
          %s368 = sand.u32 %s68, 1
          %s369 = smul.addr %s368, 16
          %s370 = scalar_lea.vmem [#allocation9], %s369
          %s371 = ssub.s32 1, %s30
          %s373 = ssub.s32 256, 256
          %374 = vsyncadd %s367, %s373
          %s375 = smul.addr %s371, 4
          %s376 = smul.addr %s375, 64
          %s377 = scalar_lea.hbm %s1, %s376
          %s378 = sshll.u32 %s370, 4
          %s379 = int_to_ptr.vmem [resolvable:$true] %s378
          %384 = dma.hbm_to_vmem [thread:$0]  %s377, 256, %s379, %s367, 64, 64, 4
        $region48: #{tpu_custom_call.1} parent=39 // pred_fallthru
          _
      $region40: #{tpu_custom_call.1} parent=5 // pred_fallthru
        _
      %p385 = scmp.le.s32.totalorder 1, %s30
      %p386 = scmp.lt.s32.totalorder %s30, 3
      %p387 = pnand %p385, %p386
      %p388 = pneg %p387
      // Predicated region
      $region49: #{tpu_custom_call.1} parent=5 // pred_check
        _
      $region50: #{tpu_custom_call.1} parent=5 // pred_check_branch
        %390 = sbr.rel (%p387) target = $region52
      $region51: #{tpu_custom_call.1} parent=5 // pred_region
        %s391 = ssub.s32 %s30, 1
        %s392 = sand.u32 %s43, 1
        %s393 = scalar_lea.sflag [#allocation7], %s392
        %s394 = sand.u32 %s43, 1
        %s395 = smul.addr %s394, 16
        %s396 = scalar_lea.vmem [#allocation6], %s395
        // Predicated region
        $region53: #{tpu_custom_call.1} parent=51 // pred_check
          %p397 = pneg %p56
        $region54: #{tpu_custom_call.1} parent=51 // pred_check_branch
          %399 = sbr.rel (%p397) target = $region56
        $region55: #{tpu_custom_call.1} parent=51 // pred_region
          %400 = dma.done %s393, 256
        $region56: #{tpu_custom_call.1} parent=51 // pred_fallthru
          _
        %s401 = sand.u32 %s35, 1
        %s402 = scalar_lea.sflag [#allocation10], %s401
        %s403 = sand.u32 %s71, 1
        %s404 = smul.addr %s403, 16
        %s405 = scalar_lea.vmem [#allocation9], %s404
        // Predicated region
        $region57: #{tpu_custom_call.1} parent=51 // pred_check
          %p406 = pneg %p84
        $region58: #{tpu_custom_call.1} parent=51 // pred_check_branch
          %408 = sbr.rel (%p406) target = $region60
        $region59: #{tpu_custom_call.1} parent=51 // pred_region
          %409 = dma.done %s402, 256
        $region60: #{tpu_custom_call.1} parent=51 // pred_fallthru
          _
        // Predicated region
        $region61: #{tpu_custom_call.1} parent=51 // pred_check
          %p410 = pneg %p147
        $region62: #{tpu_custom_call.1} parent=51 // pred_check_branch
          %412 = sbr.rel (%p410) target = $region64
        $region63: #{tpu_custom_call.1} parent=51 // pred_region
          %413 = dma.done [#allocation10], 256
        $region64: #{tpu_custom_call.1} parent=51 // pred_fallthru
          _
        // Predicated region
        $region65: #{tpu_custom_call.1} parent=51 // pred_check
          %p414 = pneg %p168
        $region66: #{tpu_custom_call.1} parent=51 // pred_check_branch
          %416 = sbr.rel (%p414) target = $region68
        $region67: #{tpu_custom_call.1} parent=51 // pred_region
          %417 = dma.done [#allocation13], 512
        $region68: #{tpu_custom_call.1} parent=51 // pred_fallthru
          _
        %s418 = sand.u32 %s43, 1
        %s419 = scalar_lea.sflag [#allocation7], %s418
        %s420 = sand.u32 %s43, 1
        %s421 = smul.addr %s420, 16
        %s422 = scalar_lea.vmem [#allocation6], %s421
        %p423 = pneg %p56
        %p424 = pneg %p53
        %s425 = sand.u32 %s35, 1
        %s426 = scalar_lea.sflag [#allocation10], %s425
        %s427 = sand.u32 %s71, 1
        %s428 = smul.addr %s427, 16
        %s429 = scalar_lea.vmem [#allocation9], %s428
        %p430 = pneg %p84
        %p431 = pneg %p81
        %p432 = pneg %p105
        %p433 = pneg %p102
        %p434 = pneg %p126
        %p435 = pneg %p123
        %p436 = pneg %p147
        %p437 = pneg %p144
        %p438 = pneg %p168
        %p439 = pneg %p165
        %p440 = pneg %p189
        %p441 = pneg %p186
        %p442 = pneg %p210
        %p443 = pneg %p207
        %p444 = pneg %p236
        %p445 = pneg %p233
        %s446 = sand.u32 %s223, 1
        %s447 = scalar_lea.sflag [#allocation8], %s446
        %s448 = sand.u32 %s223, 1
        %s449 = smul.addr %s448, 32
        %s450 = scalar_lea.vmem [#allocation14], %s449
        %p451 = pneg %p264
        %p452 = pneg %p261
        %s453 = sand.u32 %s35, 1
        %s454 = scalar_lea.sflag [#allocation16], %s453
        %s455 = sand.u32 %s251, 1
        %s456 = smul.addr %s455, 32
        %s457 = scalar_lea.vmem [#allocation15], %s456
        %p458 = pneg %p285
        %p459 = pneg %p282
        %s460 = ssub.s32 1, %s35
        %s461 = ssub.s32 1, %s35
        %p463 = scmp.eq.s32.totalorder %s35, 0
        // Predicated region
        $region69: #{tpu_custom_call.1} parent=51 // pred_check
          %p464 = pneg %p463
        $region70: #{tpu_custom_call.1} parent=51 // pred_check_branch
          %466 = sbr.rel (%p464) target = $region72
        $region71: #{tpu_custom_call.1} parent=51 // pred_region
          %vm467 = vcmask 261120
          %468 = vst.msk [vmem:[#allocation2] sm:$0xff] %vm467, 0.0
          %469 = vst.msk [vmem:[#allocation3] sm:$0xff] %vm467, 0.0
          %470 = vst.msk [vmem:[#allocation4] sm:$0xff] %vm467, 0.0
          %471 = vst.msk [vmem:[#allocation5] sm:$0xff] %vm467, 0.0
        $region72: #{tpu_custom_call.1} parent=51 // pred_fallthru
          _
        %v472 = vld [vmem:[%s2] sm:$0xff]
        %v473 = vld [vmem:[%s396] sm:$0xf]
        %v474 = vld [vmem:[%s396 + $0x4] sm:$0xf]
        %v475 = vld [vmem:[%s396 + $0x8] sm:$0xf]
        %v476 = vld [vmem:[%s396 + $0xc] sm:$0xf]
        %v477 = vld [vmem:[%s405] sm:$0xf]
        %v478 = vld [vmem:[%s405 + $0x4] sm:$0xf]
        %v479 = vld [vmem:[%s405 + $0x8] sm:$0xf]
        %v480 = vld [vmem:[%s405 + $0xc] sm:$0xf]
        %v481 = vld [vmem:[%s3] sm:$0xf]
        %v482 = vld [vmem:[%s3 + $0x4] sm:$0xf]
        %v483 = vld [vmem:[%s3 + $0x8] sm:$0xf]
        %v484 = vld [vmem:[%s3 + $0xc] sm:$0xf]
        %v485 = vld [vmem:[%s6] sm:$0x1]
        %v487 = vlaneseq
        %v488 = vshrl.u32 %v487, 7
        %v489 = vsub.s32 0, %v488
        %v490 = vrot.slane %v485, %v489
        %v496 = vunpack.c.l.b16 %v473
        %v497 = vunpack.c.l.b16 %v474
        %v498 = vunpack.c.l.b16 %v475
        %v499 = vunpack.c.l.b16 %v476
        %v500 = vpack.c.b16 %v497, %v496
        %v501 = vpack.c.b16 %v499, %v498
        %v506 = vunpack.c.l.b16 %v481
        %v507 = vunpack.c.l.b16 %v482
        %v508 = vunpack.c.l.b16 %v483
        %v509 = vunpack.c.l.b16 %v484
        %v510 = vpack.c.b16 %v507, %v506
        %v511 = vpack.c.b16 %v509, %v508
        %vm514 = vcmask 261120
        %v516 = vsel %vm514, %v500, 0
        %v519 = vsel %vm514, %v501, 0
        %521 = vmatprep.subr.bf16.mxu0 0
        %522 = vmatpush1.bf16.msra.mxu0 %v510
        %523 = vmatprep.subr.bf16.mxu0 0
        %524 = vmatpush1.bf16.msra.mxu0 %v511
        %525 = vmatprep.subr.bf16.mxu0 0
        %526 = vmatpush1.bf16.msra.mxu0 0
        %527 = vmatprep.subr.bf16.mxu0 0
        %528 = vmatpush1.bf16.msra.mxu0 0
        %529 = vmatprep.subr.bf16.mxu0 0
        %530 = vmatpush1.bf16.msra.mxu0 0
        %531 = vmatprep.subr.bf16.mxu0 0
        %532 = vmatpush1.bf16.msra.mxu0 0
        %533 = vmatprep.subr.bf16.mxu0 0
        %534 = vmatpush1.bf16.msra.mxu0 0
        %535 = vmatprep.subr.bf16.mxu0 0
        %536 = vmatpush1.bf16.msra.mxu0 0
        %537 = vmatprep.subr.bf16.mxu0 0
        %538 = vmatpush1.bf16.msra.mxu0 0
        %539 = vmatprep.subr.bf16.mxu0 0
        %540 = vmatpush1.bf16.msra.mxu0 0
        %541 = vmatprep.subr.bf16.mxu0 0
        %542 = vmatpush1.bf16.msra.mxu0 0
        %543 = vmatprep.subr.bf16.mxu0 0
        %544 = vmatpush1.bf16.msra.mxu0 0
        %545 = vmatprep.subr.bf16.mxu0 0
        %546 = vmatpush1.bf16.msra.mxu0 0
        %547 = vmatprep.subr.bf16.mxu0 0
        %548 = vmatpush1.bf16.msra.mxu0 0
        %549 = vmatprep.subr.bf16.mxu0 0
        %550 = vmatpush1.bf16.msra.mxu0 0
        %551 = vmatprep.subr.bf16.mxu0 0
        %552 = vmatpush1.bf16.msra.mxu0 0
        %553 = vmatprep.mubr.bf16.mxu0 0
        %554 = vmatmul.mubr.bf16.gmra.mrb[0].mxu0 %v516
        %v555 = vpop.f32.mrb[0].mxu0
        %v556 = vadd.f32 %v490, %v555
        %v557 = vpop.f32.mrb[0].mxu0
        %v558 = vpop.f32.mrb[0].mxu0
        %v559 = vadd.f32 %v490, %v558
        %v560 = vpop.f32.mrb[0].mxu0
        %561 = vmatprep.mubr.bf16.mxu0 0
        %562 = vmatmul.mubr.bf16.gmra.mrb[0].mxu0 %v519
        %v563 = vpop.f32.mrb[0].mxu0
        %v564 = vadd.f32 %v490, %v563
        %v565 = vpop.f32.mrb[0].mxu0
        %v566 = vpop.f32.mrb[0].mxu0
        %v567 = vadd.f32 %v490, %v566
        %v568 = vpop.f32.mrb[0].mxu0
        %569 = vdwg.mxu0
        %v570 = vld [vmem:[#allocation11] sm:$0xf]
        %v571 = vld [vmem:[#allocation11 + $0x4] sm:$0xf]
        %v572 = vld [vmem:[#allocation11 + $0x8] sm:$0xf]
        %v573 = vld [vmem:[#allocation11 + $0xc] sm:$0xf]
        %v574 = vld [vmem:[%s7] sm:$0x1]
        %v576 = vlaneseq
        %v577 = vshrl.u32 %v576, 7
        %v578 = vsub.s32 0, %v577
        %v579 = vrot.slane %v574, %v578
        %v585 = vunpack.c.l.b16 %v477
        %v586 = vunpack.c.l.b16 %v478
        %v587 = vunpack.c.l.b16 %v479
        %v588 = vunpack.c.l.b16 %v480
        %v589 = vpack.c.b16 %v586, %v585
        %v590 = vpack.c.b16 %v588, %v587
        %v595 = vunpack.c.l.b16 %v570
        %v596 = vunpack.c.l.b16 %v571
        %v597 = vunpack.c.l.b16 %v572
        %v598 = vunpack.c.l.b16 %v573
        %v599 = vpack.c.b16 %v596, %v595
        %v600 = vpack.c.b16 %v598, %v597
        %v604 = vsel %vm514, %v589, 0
        %v607 = vsel %vm514, %v590, 0
        %609 = vmatprep.subr.bf16.mxu0 0
        %610 = vmatpush1.bf16.msra.mxu0 %v599
        %611 = vmatprep.subr.bf16.mxu0 0
        %612 = vmatpush1.bf16.msra.mxu0 %v600
        %613 = vmatprep.subr.bf16.mxu0 0
        %614 = vmatpush1.bf16.msra.mxu0 0
        %615 = vmatprep.subr.bf16.mxu0 0
        %616 = vmatpush1.bf16.msra.mxu0 0
        %617 = vmatprep.subr.bf16.mxu0 0
        %618 = vmatpush1.bf16.msra.mxu0 0
        %619 = vmatprep.subr.bf16.mxu0 0
        %620 = vmatpush1.bf16.msra.mxu0 0
        %621 = vmatprep.subr.bf16.mxu0 0
        %622 = vmatpush1.bf16.msra.mxu0 0
        %623 = vmatprep.subr.bf16.mxu0 0
        %624 = vmatpush1.bf16.msra.mxu0 0
        %625 = vmatprep.subr.bf16.mxu0 0
        %626 = vmatpush1.bf16.msra.mxu0 0
        %627 = vmatprep.subr.bf16.mxu0 0
        %628 = vmatpush1.bf16.msra.mxu0 0
        %629 = vmatprep.subr.bf16.mxu0 0
        %630 = vmatpush1.bf16.msra.mxu0 0
        %631 = vmatprep.subr.bf16.mxu0 0
        %632 = vmatpush1.bf16.msra.mxu0 0
        %633 = vmatprep.subr.bf16.mxu0 0
        %634 = vmatpush1.bf16.msra.mxu0 0
        %635 = vmatprep.subr.bf16.mxu0 0
        %636 = vmatpush1.bf16.msra.mxu0 0
        %637 = vmatprep.subr.bf16.mxu0 0
        %638 = vmatpush1.bf16.msra.mxu0 0
        %639 = vmatprep.subr.bf16.mxu0 0
        %640 = vmatpush1.bf16.msra.mxu0 0
        %641 = vmatprep.mubr.bf16.mxu0 0
        %642 = vmatmul.mubr.bf16.gmra.mrb[0].mxu0 %v604
        %v643 = vpop.f32.mrb[0].mxu0
        %v644 = vadd.f32 %v579, %v643
        %v645 = vpop.f32.mrb[0].mxu0
        %v646 = vpop.f32.mrb[0].mxu0
        %v647 = vadd.f32 %v579, %v646
        %v648 = vpop.f32.mrb[0].mxu0
        %649 = vmatprep.mubr.bf16.mxu0 0
        %650 = vmatmul.mubr.bf16.gmra.mrb[0].mxu0 %v607
        %v651 = vpop.f32.mrb[0].mxu0
        %v652 = vadd.f32 %v579, %v651
        %v653 = vpop.f32.mrb[0].mxu0
        %v654 = vpop.f32.mrb[0].mxu0
        %v655 = vadd.f32 %v579, %v654
        %v656 = vpop.f32.mrb[0].mxu0
        %657 = vdwg.mxu0
        %v658 = vld [vmem:[#allocation12] sm:$0xff]
        %v659 = vld [vmem:[#allocation12 + $0x8] sm:$0xff]
        %v660 = vld [vmem:[#allocation12 + $0x10] sm:$0xff]
        %v661 = vld [vmem:[#allocation12 + $0x18] sm:$0xff]
        %s662 = smul.u32 %s35, 4
        %s663 = ssub.s32 1, %s35
        %s664 = smul.u32 %s663, 4
        %v665 = vld [vmem:[#allocation2] sm:$0xff]
        %v666 = vld [vmem:[#allocation3] sm:$0xff]
        %v667 = vld [vmem:[#allocation4] sm:$0xff]
        %v668 = vld [vmem:[#allocation5] sm:$0xff]
        %v669 = vpack.c.bf16 %v667, %v665
        %v674 = vunpack.c.l.b16 %v658
        %v675 = vunpack.c.h.b16 %v658
        %v676 = vunpack.c.l.b16 %v659
        %v677 = vunpack.c.h.b16 %v659
        %v678 = vunpack.c.l.b16 %v660
        %v679 = vunpack.c.h.b16 %v660
        %v680 = vunpack.c.l.b16 %v661
        %v681 = vunpack.c.h.b16 %v661
        %v682 = vpack.c.b16 %v676, %v674
        %v683 = vpack.c.b16 %v677, %v675
        %v684 = vpack.c.b16 %v680, %v678
        %v685 = vpack.c.b16 %v681, %v679
        %v691 = vsel %vm514, %v669, 0
        %693 = vmatprep.subr.bf16.mxu0 %v683
        %694 = vmatpush1.bf16.msra.mxu0 %v682
        %695 = vmatprep.subr.bf16.mxu0 %v685
        %696 = vmatpush1.bf16.msra.mxu0 %v684
        %697 = vmatprep.subr.bf16.mxu0 0
        %698 = vmatpush1.bf16.msra.mxu0 0
        %699 = vmatprep.subr.bf16.mxu0 0
        %700 = vmatpush1.bf16.msra.mxu0 0
        %701 = vmatprep.subr.bf16.mxu0 0
        %702 = vmatpush1.bf16.msra.mxu0 0
        %703 = vmatprep.subr.bf16.mxu0 0
        %704 = vmatpush1.bf16.msra.mxu0 0
        %705 = vmatprep.subr.bf16.mxu0 0
        %706 = vmatpush1.bf16.msra.mxu0 0
        %707 = vmatprep.subr.bf16.mxu0 0
        %708 = vmatpush1.bf16.msra.mxu0 0
        %709 = vmatprep.subr.bf16.mxu0 0
        %710 = vmatpush1.bf16.msra.mxu0 0
        %711 = vmatprep.subr.bf16.mxu0 0
        %712 = vmatpush1.bf16.msra.mxu0 0
        %713 = vmatprep.subr.bf16.mxu0 0
        %714 = vmatpush1.bf16.msra.mxu0 0
        %715 = vmatprep.subr.bf16.mxu0 0
        %716 = vmatpush1.bf16.msra.mxu0 0
        %717 = vmatprep.subr.bf16.mxu0 0
        %718 = vmatpush1.bf16.msra.mxu0 0
        %719 = vmatprep.subr.bf16.mxu0 0
        %720 = vmatpush1.bf16.msra.mxu0 0
        %721 = vmatprep.subr.bf16.mxu0 0
        %722 = vmatpush1.bf16.msra.mxu0 0
        %723 = vmatprep.subr.bf16.mxu0 0
        %724 = vmatpush1.bf16.msra.mxu0 0
        %725 = vmatprep.mubr.bf16.mxu0 0
        %726 = vmatmul.mubr.bf16.gmra.mrb[0].mxu0 %v691
        %v727 = vpop.f32.mrb[0].mxu0
        %v728 = vadd.f32 0.0, %v727
        %v729 = vpop.f32.mrb[0].mxu0
        %v730 = vpop.f32.mrb[0].mxu0
        %v731 = vpop.f32.mrb[0].mxu0
        %v732 = vadd.f32 0.0, %v731
        %733 = vdwg.mxu0
        %v734 = vadd.f32 %v556, %v728
        %v735 = vxor.u32 %v734, 2147483648
        %v736 = vmul.f32 %v735, 1.442695
        %v737 = vpow.pop %v736
        %v738 = vadd.f32 %v737, 1.0
        %v739 = vrcp.pop %v738
        %v740 = vmul.f32 1.0, %v739
        %v741 = vtanh.pop %v734
        %743 = vrot.lane.b32.xlu0 %v666, 32
        %v744 = vpop.permute.xlu0 %743
        %v746 = vmul.f32 %v740, %v744
        %748 = vrot.lane.b32.xlu0 %v741, 32
        %v749 = vpop.permute.xlu0 %748
        %v751 = vmul.f32 %v740, %v749
        %753 = vrot.lane.b32.xlu0 %v751, 32
        %v754 = vpop.permute.xlu0 %753
        %v756 = vadd.f32 %v746, %v754
        %v757 = vtanh.pop %v756
        %759 = vrot.lane.b32.xlu0 %v757, 32
        %v760 = vpop.permute.xlu0 %759
        %v762 = vmul.f32 %v740, %v760
        %v763 = vadd.f32 %v655, %v732
        %v764 = vxor.u32 %v763, 2147483648
        %v765 = vmul.f32 %v764, 1.442695
        %v766 = vpow.pop %v765
        %v767 = vadd.f32 %v766, 1.0
        %v768 = vrcp.pop %v767
        %v769 = vmul.f32 1.0, %v768
        %v770 = vtanh.pop %v763
        %772 = vrot.lane.b32.xlu0 %v668, 32
        %v773 = vpop.permute.xlu0 %772
        %v775 = vmul.f32 %v769, %v773
        %777 = vrot.lane.b32.xlu0 %v770, 32
        %v778 = vpop.permute.xlu0 %777
        %v780 = vmul.f32 %v769, %v778
        %782 = vrot.lane.b32.xlu0 %v780, 32
        %v783 = vpop.permute.xlu0 %782
        %v785 = vadd.f32 %v775, %v783
        %v786 = vtanh.pop %v785
        %788 = vrot.lane.b32.xlu0 %v786, 32
        %v789 = vpop.permute.xlu0 %788
        %v791 = vmul.f32 %v769, %v789
        %v792 = vstv %s662
        %vm793 = vcmp.lt.s32.totalorder %v792, %v472
        %v794 = vsel %vm793, 1, 0
        %795 = vset.pattern.permute.xlu0 0
        %796 = vperm.xlu0 %795, %v794
        %v797 = vpop.permute.xlu0 %796
        %vm798 = vcmp.eq.s32.totalorder %v797, 1
        %800 = vrot.lane.b32.xlu0 %v665, 64
        %v801 = vpop.permute.xlu0 %800
        %v803 = vsel %vm798, %v762, %v801
        %v804 = vsel %vm798, %v756, %v744
        %v805 = vsel %vm798, %v762, 0.0
        %807 = vrot.lane.b32.xlu0 %v805, 64
        %v808 = vpop.permute.xlu0 %807
        %810 = vst.msk [vmem:[%s450] sm:$0xff] %vm514, %v808
        %s811 = sadd.s32 %s664, 3
        %v812 = vstv %s811
        %vm813 = vcmp.lt.s32.totalorder %v812, %v472
        %v814 = vsel %vm813, 1, 0
        %815 = vset.pattern.permute.xlu0 0
        %816 = vperm.xlu0 %815, %v814
        %v817 = vpop.permute.xlu0 %816
        %vm818 = vcmp.eq.s32.totalorder %v817, 1
        %820 = vrot.lane.b32.xlu0 %v667, 64
        %v821 = vpop.permute.xlu0 %820
        %v823 = vsel %vm818, %v791, %v821
        %v824 = vsel %vm818, %v785, %v773
        %v825 = vsel %vm818, %v791, 0.0
        %827 = vrot.lane.b32.xlu0 %v825, 64
        %v828 = vpop.permute.xlu0 %827
        %830 = vst.msk [vmem:[%s457 + $0x18] sm:$0xff] %vm514, %v828
        %v831 = vpack.c.bf16 %v823, %v803
        %833 = vrot.lane.b32.xlu0 %v831, 64
        %v834 = vpop.permute.xlu0 %833
        %v836 = vsel %vm514, %v834, 0
        %838 = vmatprep.subr.bf16.mxu0 %v683
        %839 = vmatpush1.bf16.msra.mxu0 %v682
        %840 = vmatprep.subr.bf16.mxu0 %v685
        %841 = vmatpush1.bf16.msra.mxu0 %v684
        %842 = vmatprep.subr.bf16.mxu0 0
        %843 = vmatpush1.bf16.msra.mxu0 0
        %844 = vmatprep.subr.bf16.mxu0 0
        %845 = vmatpush1.bf16.msra.mxu0 0
        %846 = vmatprep.subr.bf16.mxu0 0
        %847 = vmatpush1.bf16.msra.mxu0 0
        %848 = vmatprep.subr.bf16.mxu0 0
        %849 = vmatpush1.bf16.msra.mxu0 0
        %850 = vmatprep.subr.bf16.mxu0 0
        %851 = vmatpush1.bf16.msra.mxu0 0
        %852 = vmatprep.subr.bf16.mxu0 0
        %853 = vmatpush1.bf16.msra.mxu0 0
        %854 = vmatprep.subr.bf16.mxu0 0
        %855 = vmatpush1.bf16.msra.mxu0 0
        %856 = vmatprep.subr.bf16.mxu0 0
        %857 = vmatpush1.bf16.msra.mxu0 0
        %858 = vmatprep.subr.bf16.mxu0 0
        %859 = vmatpush1.bf16.msra.mxu0 0
        %860 = vmatprep.subr.bf16.mxu0 0
        %861 = vmatpush1.bf16.msra.mxu0 0
        %862 = vmatprep.subr.bf16.mxu0 0
        %863 = vmatpush1.bf16.msra.mxu0 0
        %864 = vmatprep.subr.bf16.mxu0 0
        %865 = vmatpush1.bf16.msra.mxu0 0
        %866 = vmatprep.subr.bf16.mxu0 0
        %867 = vmatpush1.bf16.msra.mxu0 0
        %868 = vmatprep.subr.bf16.mxu0 0
        %869 = vmatpush1.bf16.msra.mxu0 0
        %870 = vmatprep.mubr.bf16.mxu0 0
        %871 = vmatmul.mubr.bf16.gmra.mrb[0].mxu0 %v836
        %v872 = vpop.f32.mrb[0].mxu0
        %v873 = vadd.f32 0.0, %v872
        %v874 = vpop.f32.mrb[0].mxu0
        %v875 = vpop.f32.mrb[0].mxu0
        %v876 = vpop.f32.mrb[0].mxu0
        %v877 = vadd.f32 0.0, %v876
        %878 = vdwg.mxu0
        %v879 = vadd.f32 %v559, %v873
        %v880 = vxor.u32 %v879, 2147483648
        %v881 = vmul.f32 %v880, 1.442695
        %v882 = vpow.pop %v881
        %v883 = vadd.f32 %v882, 1.0
        %v884 = vrcp.pop %v883
        %v885 = vmul.f32 1.0, %v884
        %v886 = vtanh.pop %v879
        %v887 = vmul.f32 %v885, %v804
        %889 = vrot.lane.b32.xlu0 %v886, 32
        %v890 = vpop.permute.xlu0 %889
        %v892 = vmul.f32 %v885, %v890
        %894 = vrot.lane.b32.xlu0 %v892, 32
        %v895 = vpop.permute.xlu0 %894
        %v897 = vadd.f32 %v887, %v895
        %v898 = vtanh.pop %v897
        %900 = vrot.lane.b32.xlu0 %v898, 32
        %v901 = vpop.permute.xlu0 %900
        %v903 = vmul.f32 %v885, %v901
        %v904 = vadd.f32 %v652, %v877
        %v905 = vxor.u32 %v904, 2147483648
        %v906 = vmul.f32 %v905, 1.442695
        %v907 = vpow.pop %v906
        %v908 = vadd.f32 %v907, 1.0
        %v909 = vrcp.pop %v908
        %v910 = vmul.f32 1.0, %v909
        %v911 = vtanh.pop %v904
        %v912 = vmul.f32 %v910, %v824
        %914 = vrot.lane.b32.xlu0 %v911, 32
        %v915 = vpop.permute.xlu0 %914
        %v917 = vmul.f32 %v910, %v915
        %919 = vrot.lane.b32.xlu0 %v917, 32
        %v920 = vpop.permute.xlu0 %919
        %v922 = vadd.f32 %v912, %v920
        %v923 = vtanh.pop %v922
        %925 = vrot.lane.b32.xlu0 %v923, 32
        %v926 = vpop.permute.xlu0 %925
        %v928 = vmul.f32 %v910, %v926
        %s929 = sadd.s32 %s662, 1
        %v930 = vstv %s929
        %vm931 = vcmp.lt.s32.totalorder %v930, %v472
        %v932 = vsel %vm931, 1, 0
        %933 = vset.pattern.permute.xlu0 0
        %934 = vperm.xlu0 %933, %v932
        %v935 = vpop.permute.xlu0 %934
        %vm936 = vcmp.eq.s32.totalorder %v935, 1
        %v937 = vsel %vm936, %v903, %v803
        %v938 = vsel %vm936, %v897, %v804
        %v939 = vsel %vm936, %v903, 0.0
        %941 = vrot.lane.b32.xlu0 %v939, 64
        %v942 = vpop.permute.xlu0 %941
        %944 = vst.msk [vmem:[%s450 + $0x8] sm:$0xff] %vm514, %v942
        %s945 = sadd.s32 %s664, 2
        %v946 = vstv %s945
        %vm947 = vcmp.lt.s32.totalorder %v946, %v472
        %v948 = vsel %vm947, 1, 0
        %949 = vset.pattern.permute.xlu0 0
        %950 = vperm.xlu0 %949, %v948
        %v951 = vpop.permute.xlu0 %950
        %vm952 = vcmp.eq.s32.totalorder %v951, 1
        %v953 = vsel %vm952, %v928, %v823
        %v954 = vsel %vm952, %v922, %v824
        %v955 = vsel %vm952, %v928, 0.0
        %957 = vrot.lane.b32.xlu0 %v955, 64
        %v958 = vpop.permute.xlu0 %957
        %960 = vst.msk [vmem:[%s457 + $0x10] sm:$0xff] %vm514, %v958
        %v961 = vpack.c.bf16 %v953, %v937
        %963 = vrot.lane.b32.xlu0 %v961, 64
        %v964 = vpop.permute.xlu0 %963
        %v966 = vsel %vm514, %v964, 0
        %968 = vmatprep.subr.bf16.mxu0 %v683
        %969 = vmatpush1.bf16.msra.mxu0 %v682
        %970 = vmatprep.subr.bf16.mxu0 %v685
        %971 = vmatpush1.bf16.msra.mxu0 %v684
        %972 = vmatprep.subr.bf16.mxu0 0
        %973 = vmatpush1.bf16.msra.mxu0 0
        %974 = vmatprep.subr.bf16.mxu0 0
        %975 = vmatpush1.bf16.msra.mxu0 0
        %976 = vmatprep.subr.bf16.mxu0 0
        %977 = vmatpush1.bf16.msra.mxu0 0
        %978 = vmatprep.subr.bf16.mxu0 0
        %979 = vmatpush1.bf16.msra.mxu0 0
        %980 = vmatprep.subr.bf16.mxu0 0
        %981 = vmatpush1.bf16.msra.mxu0 0
        %982 = vmatprep.subr.bf16.mxu0 0
        %983 = vmatpush1.bf16.msra.mxu0 0
        %984 = vmatprep.subr.bf16.mxu0 0
        %985 = vmatpush1.bf16.msra.mxu0 0
        %986 = vmatprep.subr.bf16.mxu0 0
        %987 = vmatpush1.bf16.msra.mxu0 0
        %988 = vmatprep.subr.bf16.mxu0 0
        %989 = vmatpush1.bf16.msra.mxu0 0
        %990 = vmatprep.subr.bf16.mxu0 0
        %991 = vmatpush1.bf16.msra.mxu0 0
        %992 = vmatprep.subr.bf16.mxu0 0
        %993 = vmatpush1.bf16.msra.mxu0 0
        %994 = vmatprep.subr.bf16.mxu0 0
        %995 = vmatpush1.bf16.msra.mxu0 0
        %996 = vmatprep.subr.bf16.mxu0 0
        %997 = vmatpush1.bf16.msra.mxu0 0
        %998 = vmatprep.subr.bf16.mxu0 0
        %999 = vmatpush1.bf16.msra.mxu0 0
        %1000 = vmatprep.mubr.bf16.mxu0 0
        %1001 = vmatmul.mubr.bf16.gmra.mrb[0].mxu0 %v966
        %v1002 = vpop.f32.mrb[0].mxu0
        %v1003 = vadd.f32 0.0, %v1002
        %v1004 = vpop.f32.mrb[0].mxu0
        %v1005 = vpop.f32.mrb[0].mxu0
        %v1006 = vpop.f32.mrb[0].mxu0
        %v1007 = vadd.f32 0.0, %v1006
        %1008 = vdwg.mxu0
        %v1009 = vadd.f32 %v564, %v1003
        %v1010 = vxor.u32 %v1009, 2147483648
        %v1011 = vmul.f32 %v1010, 1.442695
        %v1012 = vpow.pop %v1011
        %v1013 = vadd.f32 %v1012, 1.0
        %v1014 = vrcp.pop %v1013
        %v1015 = vmul.f32 1.0, %v1014
        %v1016 = vtanh.pop %v1009
        %v1017 = vmul.f32 %v1015, %v938
        %1019 = vrot.lane.b32.xlu0 %v1016, 32
        %v1020 = vpop.permute.xlu0 %1019
        %v1022 = vmul.f32 %v1015, %v1020
        %1024 = vrot.lane.b32.xlu0 %v1022, 32
        %v1025 = vpop.permute.xlu0 %1024
        %v1027 = vadd.f32 %v1017, %v1025
        %v1028 = vtanh.pop %v1027
        %1030 = vrot.lane.b32.xlu0 %v1028, 32
        %v1031 = vpop.permute.xlu0 %1030
        %v1033 = vmul.f32 %v1015, %v1031
        %v1034 = vadd.f32 %v647, %v1007
        %v1035 = vxor.u32 %v1034, 2147483648
        %v1036 = vmul.f32 %v1035, 1.442695
        %v1037 = vpow.pop %v1036
        %v1038 = vadd.f32 %v1037, 1.0
        %v1039 = vrcp.pop %v1038
        %v1040 = vmul.f32 1.0, %v1039
        %v1041 = vtanh.pop %v1034
        %v1042 = vmul.f32 %v1040, %v954
        %1044 = vrot.lane.b32.xlu0 %v1041, 32
        %v1045 = vpop.permute.xlu0 %1044
        %v1047 = vmul.f32 %v1040, %v1045
        %1049 = vrot.lane.b32.xlu0 %v1047, 32
        %v1050 = vpop.permute.xlu0 %1049
        %v1052 = vadd.f32 %v1042, %v1050
        %v1053 = vtanh.pop %v1052
        %1055 = vrot.lane.b32.xlu0 %v1053, 32
        %v1056 = vpop.permute.xlu0 %1055
        %v1058 = vmul.f32 %v1040, %v1056
        %s1059 = sadd.s32 %s662, 2
        %v1060 = vstv %s1059
        %vm1061 = vcmp.lt.s32.totalorder %v1060, %v472
        %v1062 = vsel %vm1061, 1, 0
        %1063 = vset.pattern.permute.xlu0 0
        %1064 = vperm.xlu0 %1063, %v1062
        %v1065 = vpop.permute.xlu0 %1064
        %vm1066 = vcmp.eq.s32.totalorder %v1065, 1
        %v1067 = vsel %vm1066, %v1033, %v937
        %v1068 = vsel %vm1066, %v1027, %v938
        %v1069 = vsel %vm1066, %v1033, 0.0
        %1071 = vrot.lane.b32.xlu0 %v1069, 64
        %v1072 = vpop.permute.xlu0 %1071
        %1074 = vst.msk [vmem:[%s450 + $0x10] sm:$0xff] %vm514, %v1072
        %s1075 = sadd.s32 %s664, 1
        %v1076 = vstv %s1075
        %vm1077 = vcmp.lt.s32.totalorder %v1076, %v472
        %v1078 = vsel %vm1077, 1, 0
        %1079 = vset.pattern.permute.xlu0 0
        %1080 = vperm.xlu0 %1079, %v1078
        %v1081 = vpop.permute.xlu0 %1080
        %vm1082 = vcmp.eq.s32.totalorder %v1081, 1
        %v1083 = vsel %vm1082, %v1058, %v953
        %v1084 = vsel %vm1082, %v1052, %v954
        %v1085 = vsel %vm1082, %v1058, 0.0
        %1087 = vrot.lane.b32.xlu0 %v1085, 64
        %v1088 = vpop.permute.xlu0 %1087
        %1090 = vst.msk [vmem:[%s457 + $0x8] sm:$0xff] %vm514, %v1088
        %v1091 = vpack.c.bf16 %v1083, %v1067
        %1093 = vrot.lane.b32.xlu0 %v1091, 64
        %v1094 = vpop.permute.xlu0 %1093
        %v1096 = vsel %vm514, %v1094, 0
        %1098 = vmatprep.subr.bf16.mxu0 %v683
        %1099 = vmatpush1.bf16.msra.mxu0 %v682
        %1100 = vmatprep.subr.bf16.mxu0 %v685
        %1101 = vmatpush1.bf16.msra.mxu0 %v684
        %1102 = vmatprep.subr.bf16.mxu0 0
        %1103 = vmatpush1.bf16.msra.mxu0 0
        %1104 = vmatprep.subr.bf16.mxu0 0
        %1105 = vmatpush1.bf16.msra.mxu0 0
        %1106 = vmatprep.subr.bf16.mxu0 0
        %1107 = vmatpush1.bf16.msra.mxu0 0
        %1108 = vmatprep.subr.bf16.mxu0 0
        %1109 = vmatpush1.bf16.msra.mxu0 0
        %1110 = vmatprep.subr.bf16.mxu0 0
        %1111 = vmatpush1.bf16.msra.mxu0 0
        %1112 = vmatprep.subr.bf16.mxu0 0
        %1113 = vmatpush1.bf16.msra.mxu0 0
        %1114 = vmatprep.subr.bf16.mxu0 0
        %1115 = vmatpush1.bf16.msra.mxu0 0
        %1116 = vmatprep.subr.bf16.mxu0 0
        %1117 = vmatpush1.bf16.msra.mxu0 0
        %1118 = vmatprep.subr.bf16.mxu0 0
        %1119 = vmatpush1.bf16.msra.mxu0 0
        %1120 = vmatprep.subr.bf16.mxu0 0
        %1121 = vmatpush1.bf16.msra.mxu0 0
        %1122 = vmatprep.subr.bf16.mxu0 0
        %1123 = vmatpush1.bf16.msra.mxu0 0
        %1124 = vmatprep.subr.bf16.mxu0 0
        %1125 = vmatpush1.bf16.msra.mxu0 0
        %1126 = vmatprep.subr.bf16.mxu0 0
        %1127 = vmatpush1.bf16.msra.mxu0 0
        %1128 = vmatprep.subr.bf16.mxu0 0
        %1129 = vmatpush1.bf16.msra.mxu0 0
        %1130 = vmatprep.mubr.bf16.mxu0 0
        %1131 = vmatmul.mubr.bf16.gmra.mrb[0].mxu0 %v1096
        %v1132 = vpop.f32.mrb[0].mxu0
        %v1133 = vadd.f32 0.0, %v1132
        %v1134 = vpop.f32.mrb[0].mxu0
        %v1135 = vpop.f32.mrb[0].mxu0
        %v1136 = vpop.f32.mrb[0].mxu0
        %v1137 = vadd.f32 0.0, %v1136
        %1138 = vdwg.mxu0
        %v1139 = vadd.f32 %v567, %v1133
        %v1140 = vxor.u32 %v1139, 2147483648
        %v1141 = vmul.f32 %v1140, 1.442695
        %v1142 = vpow.pop %v1141
        %v1143 = vadd.f32 %v1142, 1.0
        %v1144 = vrcp.pop %v1143
        %v1145 = vmul.f32 1.0, %v1144
        %v1146 = vtanh.pop %v1139
        %v1147 = vmul.f32 %v1145, %v1068
        %1149 = vrot.lane.b32.xlu0 %v1146, 32
        %v1150 = vpop.permute.xlu0 %1149
        %v1152 = vmul.f32 %v1145, %v1150
        %1154 = vrot.lane.b32.xlu0 %v1152, 32
        %v1155 = vpop.permute.xlu0 %1154
        %v1157 = vadd.f32 %v1147, %v1155
        %v1158 = vtanh.pop %v1157
        %1160 = vrot.lane.b32.xlu0 %v1158, 32
        %v1161 = vpop.permute.xlu0 %1160
        %v1163 = vmul.f32 %v1145, %v1161
        %v1164 = vadd.f32 %v644, %v1137
        %v1165 = vxor.u32 %v1164, 2147483648
        %v1166 = vmul.f32 %v1165, 1.442695
        %v1167 = vpow.pop %v1166
        %v1168 = vadd.f32 %v1167, 1.0
        %v1169 = vrcp.pop %v1168
        %v1170 = vmul.f32 1.0, %v1169
        %v1171 = vtanh.pop %v1164
        %v1172 = vmul.f32 %v1170, %v1084
        %1174 = vrot.lane.b32.xlu0 %v1171, 32
        %v1175 = vpop.permute.xlu0 %1174
        %v1177 = vmul.f32 %v1170, %v1175
        %1179 = vrot.lane.b32.xlu0 %v1177, 32
        %v1180 = vpop.permute.xlu0 %1179
        %v1182 = vadd.f32 %v1172, %v1180
        %v1183 = vtanh.pop %v1182
        %1185 = vrot.lane.b32.xlu0 %v1183, 32
        %v1186 = vpop.permute.xlu0 %1185
        %v1188 = vmul.f32 %v1170, %v1186
        %s1189 = sadd.s32 %s662, 3
        %v1190 = vstv %s1189
        %vm1191 = vcmp.lt.s32.totalorder %v1190, %v472
        %v1192 = vsel %vm1191, 1, 0
        %1193 = vset.pattern.permute.xlu0 0
        %1194 = vperm.xlu0 %1193, %v1192
        %v1195 = vpop.permute.xlu0 %1194
        %vm1196 = vcmp.eq.s32.totalorder %v1195, 1
        %v1197 = vsel %vm1196, %v1163, %v1067
        %v1198 = vsel %vm1196, %v1157, %v1068
        %v1199 = vsel %vm1196, %v1163, 0.0
        %1201 = vrot.lane.b32.xlu0 %v1199, 64
        %v1202 = vpop.permute.xlu0 %1201
        %1204 = vst.msk [vmem:[%s450 + $0x18] sm:$0xff] %vm514, %v1202
        %v1205 = vstv %s664
        %vm1206 = vcmp.lt.s32.totalorder %v1205, %v472
        %v1207 = vsel %vm1206, 1, 0
        %1208 = vset.pattern.permute.xlu0 0
        %1209 = vperm.xlu0 %1208, %v1207
        %v1210 = vpop.permute.xlu0 %1209
        %vm1211 = vcmp.eq.s32.totalorder %v1210, 1
        %v1212 = vsel %vm1211, %v1188, %v1083
        %v1213 = vsel %vm1211, %v1182, %v1084
        %v1214 = vsel %vm1211, %v1188, 0.0
        %1216 = vrot.lane.b32.xlu0 %v1214, 64
        %v1217 = vpop.permute.xlu0 %1216
        %1219 = vst.msk [vmem:[%s457] sm:$0xff] %vm514, %v1217
        %1221 = vrot.lane.b32.xlu0 %v1197, 64
        %v1222 = vpop.permute.xlu0 %1221
        %1224 = vst.msk [vmem:[#allocation2] sm:$0xff] %vm514, %v1222
        %1226 = vrot.lane.b32.xlu0 %v1198, 96
        %v1227 = vpop.permute.xlu0 %1226
        %1229 = vst.msk [vmem:[#allocation3] sm:$0xff] %vm514, %v1227
        %1231 = vrot.lane.b32.xlu0 %v1212, 64
        %v1232 = vpop.permute.xlu0 %1231
        %1234 = vst.msk [vmem:[#allocation4] sm:$0xff] %vm514, %v1232
        %1236 = vrot.lane.b32.xlu0 %v1213, 96
        %v1237 = vpop.permute.xlu0 %1236
        %1239 = vst.msk [vmem:[#allocation5] sm:$0xff] %vm514, %v1237
        %p1240 = scmp.eq.s32.totalorder %s35, 1
        // Predicated region
        $region73: #{tpu_custom_call.1} parent=51 // pred_check
          %p1241 = pneg %p1240
        $region74: #{tpu_custom_call.1} parent=51 // pred_check_branch
          %1243 = sbr.rel (%p1241) target = $region76
        $region75: #{tpu_custom_call.1} parent=51 // pred_region
          %1244 = vst.msk [vmem:[#allocation17] sm:$0xff] %vm514, %v1222
          %1245 = vrot.lane.b32.xlu0 %v1212, 96
          %v1246 = vpop.permute.xlu0 %1245
          %vm1248 = vcmask 523520
          %1249 = vst.msk [vmem:[#allocation17] sm:$0xff] %vm1248, %v1246
        $region76: #{tpu_custom_call.1} parent=51 // pred_fallthru
          _
        %s1250 = sand.u32 %s223, 1
        %s1251 = scalar_lea.sflag [#allocation8], %s1250
        %s1252 = sand.u32 %s223, 1
        %s1253 = smul.addr %s1252, 32
        %s1254 = scalar_lea.vmem [#allocation14], %s1253
        %s1255 = sand.u32 %s35, 1
        %s1256 = scalar_lea.sflag [#allocation16], %s1255
        %s1257 = sand.u32 %s251, 1
        %s1258 = smul.addr %s1257, 32
        %s1259 = scalar_lea.vmem [#allocation15], %s1258
        // Predicated region
        $region77: #{tpu_custom_call.1} parent=51 // pred_check
          %p1260 = pneg %p233
        $region78: #{tpu_custom_call.1} parent=51 // pred_check_branch
          %1262 = sbr.rel (%p1260) target = $region80
        $region79: #{tpu_custom_call.1} parent=51 // pred_region
          %s1264 = ssub.s32 512, 512
          %1265 = vsyncadd %s1251, %s1264
          %s1266 = smul.addr %s35, 4
          %s1267 = smul.addr %s1266, 128
          %s1268 = scalar_lea.hbm %s8, %s1267
          %s1269 = sshll.u32 %s1254, 4
          %s1270 = int_to_ptr.vmem [resolvable:$true] %s1269
          %1275 = dma.vmem_to_hbm [thread:$0]  %s1270, 512, %s1268, %s1251, 128, 128, 8
        $region80: #{tpu_custom_call.1} parent=51 // pred_fallthru
          _
        // Predicated region
        $region81: #{tpu_custom_call.1} parent=51 // pred_check
          %p1276 = pneg %p261
        $region82: #{tpu_custom_call.1} parent=51 // pred_check_branch
          %1278 = sbr.rel (%p1276) target = $region84
        $region83: #{tpu_custom_call.1} parent=51 // pred_region
          %s1279 = ssub.s32 1, %s35
          %s1281 = ssub.s32 512, 512
          %1282 = vsyncadd %s1256, %s1281
          %s1283 = smul.addr %s1279, 4
          %s1284 = smul.addr %s1283, 128
          %s1285 = scalar_lea.hbm %s9, %s1284
          %s1286 = sshll.u32 %s1259, 4
          %s1287 = int_to_ptr.vmem [resolvable:$true] %s1286
          %1292 = dma.vmem_to_hbm [thread:$0]  %s1287, 512, %s1285, %s1256, 128, 128, 8
        $region84: #{tpu_custom_call.1} parent=51 // pred_fallthru
          _
        // Predicated region
        $region85: #{tpu_custom_call.1} parent=51 // pred_check
          %p1293 = pneg %p282
        $region86: #{tpu_custom_call.1} parent=51 // pred_check_branch
          %1295 = sbr.rel (%p1293) target = $region88
        $region87: #{tpu_custom_call.1} parent=51 // pred_region
          %s1297 = ssub.s32 128, 128
          %1298 = vsyncadd [#allocation16], %s1297
          %s1300 = sshll.u32 [#allocation17], 4
          %s1301 = int_to_ptr.vmem [resolvable:$true] %s1300
          %1303 = dma.vmem_to_hbm [thread:$0]  %s1301, 128, %s10, [#allocation16]
        $region88: #{tpu_custom_call.1} parent=51 // pred_fallthru
          _
        // Predicated region
        $region89: #{tpu_custom_call.1} parent=51 // pred_check
          %p1304 = pneg %p282
        $region90: #{tpu_custom_call.1} parent=51 // pred_check_branch
          %1306 = sbr.rel (%p1304) target = $region92
        $region91: #{tpu_custom_call.1} parent=51 // pred_region
          %1307 = dma.done [#allocation16], 128
        $region92: #{tpu_custom_call.1} parent=51 // pred_fallthru
          _
      $region52: #{tpu_custom_call.1} parent=5 // pred_fallthru
        _
      %p1308 = scmp.le.s32.totalorder 2, %s30
      // Predicated region
      $region93: #{tpu_custom_call.1} parent=5 // pred_check
        %p1309 = pneg %p1308
      $region94: #{tpu_custom_call.1} parent=5 // pred_check_branch
        %1311 = sbr.rel (%p1309) target = $region96
      $region95: #{tpu_custom_call.1} parent=5 // pred_region
        %s1312 = ssub.s32 %s30, 2
        // Predicated region
        $region97: #{tpu_custom_call.1} parent=95 // pred_check
          %p1313 = pneg %p239
        $region98: #{tpu_custom_call.1} parent=95 // pred_check_branch
          %1315 = sbr.rel (%p1313) target = $region100
        $region99: #{tpu_custom_call.1} parent=95 // pred_region
          %s1316 = sand.u32 %s224, 1
          %s1317 = scalar_lea.sflag [#allocation8], %s1316
          %s1318 = sand.u32 %s224, 1
          %s1319 = smul.addr %s1318, 32
          %s1320 = scalar_lea.vmem [#allocation14], %s1319
          %1321 = dma.done %s1317, 512
        $region100: #{tpu_custom_call.1} parent=95 // pred_fallthru
          _
        // Predicated region
        $region101: #{tpu_custom_call.1} parent=95 // pred_check
          %p1322 = pneg %p267
        $region102: #{tpu_custom_call.1} parent=95 // pred_check_branch
          %1324 = sbr.rel (%p1322) target = $region104
        $region103: #{tpu_custom_call.1} parent=95 // pred_region
          %s1325 = sand.u32 %s36, 1
          %s1326 = scalar_lea.sflag [#allocation16], %s1325
          %s1327 = sand.u32 %s252, 1
          %s1328 = smul.addr %s1327, 32
          %s1329 = scalar_lea.vmem [#allocation15], %s1328
          %1330 = dma.done %s1326, 512
        $region104: #{tpu_custom_call.1} parent=95 // pred_fallthru
          _
      $region96: #{tpu_custom_call.1} parent=5 // pred_fallthru
        _
    $region6: #{tpu_custom_call.1} parent=1 // loop_footer
      %s34 = sadd.s32 1, %s30
    $region7: #{tpu_custom_call.1} parent=1 // loop_footer_branch
      %29 = sbr.rel target = $region3
    $region8: #{tpu_custom_call.1} parent=1 // loop_exit
      _
    %1331 = vsyncpa [#allocation7], 1
    %s1332 = scalar_lea.sflag [#allocation7], 1
    %1333 = vsyncpa %s1332, 1
    %1334 = vsyncpa [#allocation10], 1
    %s1335 = scalar_lea.sflag [#allocation10], 1
    %1336 = vsyncpa %s1335, 1
    %1337 = vsyncpa [#allocation13], 1
    %1338 = vsyncpa [#allocation8], 1
    %s1339 = scalar_lea.sflag [#allocation8], 1
    %1340 = vsyncpa %s1339, 1
    %1341 = vsyncpa [#allocation16], 1
    %s1342 = scalar_lea.sflag [#allocation16], 1
    %1343 = vsyncpa %s1342, 1

</llo_original>
